<compile_context>
chip_gen: v6e
topology: v6e:2x2x1
jax: 0.10.0
libtpu: 0.0.40
codegen_flags: <defaults>
</compile_context>

<pallas_src>
import jax
import jax.numpy as jnp
from jax import lax
from jax.experimental import pallas as pl
from jax.experimental.pallas import tpu as pltpu

D_IN, H1, H2, H3, D_OUT = 180, 360, 360, 100, 1
D_IN_PAD = 256   # K padding for layer 1 (MXU-friendly, multiple of 128)
H3_PAD = 128     # padding for layer-3 output / layer-4 contraction dim


def _round_up(x, m):
    return (x + m - 1) // m * m


def mlp_kernel(x_ref,
               w1_ref, b1_ref,
               w2_ref, b2_ref,
               w3_ref, b3_ref,
               w4_ref, b4_ref,
               o_ref):
    """Entire 4-layer MLP fused in one kernel body (MXU matmuls + VPU bias/ReLU)."""
    wdt = w1_ref.dtype                      # f32 or bf16 (weight storage dtype)
    x = x_ref[...]                          # (tb, 256) f32; cols >= 180 are zero

    h = jnp.dot(x.astype(wdt), w1_ref[...], preferred_element_type=jnp.float32)
    h = jnp.maximum(h + b1_ref[...], 0.0)   # (tb, 360) f32

    h = jnp.dot(h.astype(wdt), w2_ref[...], preferred_element_type=jnp.float32)
    h = jnp.maximum(h + b2_ref[...], 0.0)   # (tb, 360) f32

    h = jnp.dot(h.astype(wdt), w3_ref[...], preferred_element_type=jnp.float32)
    h = jnp.maximum(h + b3_ref[...], 0.0)   # (tb, 128) f32; cols >= 100 are zero

    # Final layer (out_features = 1): contract the 128-wide feature dim of h against
    # the (1, 128) weight row -> lane-dense (1, tb) result, instead of an N=1 matmul
    # producing a (tb, 1) column that would need masked single-lane stores.
    out_row = lax.dot_general(
        w4_ref[...], h.astype(wdt),
        dimension_numbers=(((1,), (1,)), ((), ())),
        preferred_element_type=jnp.float32)            # (1, tb)
    o_ref[...] = (out_row + b4_ref[...]).astype(o_ref.dtype)


def init_params(key):
    """Deterministic parameter init (PyTorch nn.Linear shapes, stored transposed)."""
    dims = [(D_IN, H1), (H1, H2), (H2, H3), (H3, D_OUT)]
    params = {}
    for idx, (d_in, d_out) in enumerate(dims, start=1):
        key, kw, kb = jax.random.split(key, 3)
        bound = 1.0 / jnp.sqrt(d_in)
        params[f"w{idx}"] = jax.random.uniform(
            kw, (d_in, d_out), jnp.float32, minval=-bound, maxval=bound)
        params[f"b{idx}"] = jax.random.uniform(
            kb, (1, d_out), jnp.float32, minval=-bound, maxval=bound)
    return params


def prepare_params(params, dtype=jnp.float32):
    """Pad contraction dims to MXU-friendly sizes and cast weights to `dtype`.

    Biases stay f32 (bias add / ReLU run on the VPU in f32, v5e-safe).
    Zero padding keeps the math exact: padded x cols / w1 rows / w3 cols /
    b3 cols / w4 cols contribute exactly zero.
    """
    p = {}
    p["w1"] = jnp.zeros((D_IN_PAD, H1), dtype).at[:D_IN, :].set(
        params["w1"].astype(dtype))
    p["b1"] = params["b1"].astype(jnp.float32)
    p["w2"] = params["w2"].astype(dtype)
    p["b2"] = params["b2"].astype(jnp.float32)
    p["w3"] = jnp.zeros((H2, H3_PAD), dtype).at[:, :H3].set(
        params["w3"].astype(dtype))
    p["b3"] = jnp.zeros((1, H3_PAD), jnp.float32).at[:, :H3].set(
        params["b3"].astype(jnp.float32))
    # layer 4 weight stored as a (1, 128) row (zero-padded past col 100)
    p["w4"] = jnp.zeros((1, H3_PAD), dtype).at[:, :H3].set(
        params["w4"].reshape(1, H3).astype(dtype))
    p["b4"] = params["b4"].reshape(1, 1).astype(jnp.float32)
    return p


def mlp_forward(x, p, *, batch_tile=512):
    """x: (B, 180) float32.  p: output of prepare_params()."""
    B, d_in = x.shape
    assert d_in == D_IN

    # Batch tile: big enough to fill the MXU / amortize grid-step overhead,
    # capped at `batch_tile` (default 512) so VMEM/vreg pressure stays bounded.
    tb = min(batch_tile, max(128, _round_up(B, 8)))
    # Keep the grid >= 2 steps when the batch is big enough so the "parallel"
    # axis can shard across two TensorCores (v7x megacore).
    if pl.cdiv(B, tb) < 2 and B > 256:
        tb = _round_up(pl.cdiv(B, 2), 128)
    tb = _round_up(tb, 8)

    n_tiles = pl.cdiv(B, tb)
    b_pad = n_tiles * tb

    # Zero-pad batch to a tile multiple and features 180 -> 256.
    xp = jnp.zeros((b_pad, D_IN_PAD), x.dtype).at[:B, :D_IN].set(x)

    def full(a):
        # Constant index_map -> block stays resident in VMEM across grid steps.
        return pl.BlockSpec(a.shape, lambda i: (0, 0))

    wbytes = (p["w1"].size * p["w1"].dtype.itemsize
              + p["w2"].size * p["w2"].dtype.itemsize
              + p["w3"].size * p["w3"].dtype.itemsize
              + p["w4"].size * p["w4"].dtype.itemsize)
    flops = 2 * b_pad * (D_IN_PAD * H1 + H1 * H2 + H2 * H3_PAD + H3_PAD * 1)
    cost = pl.CostEstimate(
        flops=flops,
        transcendentals=0,
        bytes_accessed=xp.size * 4 + wbytes + b_pad * 4)

    out_slab = pl.pallas_call(
        mlp_kernel,
        out_shape=jax.ShapeDtypeStruct((n_tiles, tb), jnp.float32),
        grid_spec=pltpu.PrefetchScalarGridSpec(
            num_scalar_prefetch=0,
            grid=(n_tiles,),
            in_specs=[
                pl.BlockSpec((tb, D_IN_PAD), lambda i: (i, 0)),   # x tile
                full(p["w1"]), full(p["b1"]),
                full(p["w2"]), full(p["b2"]),
                full(p["w3"]), full(p["b3"]),
                full(p["w4"]), full(p["b4"]),
            ],
            # Lane-dense output: one (1, tb) row per grid step.
            out_specs=pl.BlockSpec((1, tb), lambda i: (i, 0)),
        ),
        compiler_params=pltpu.CompilerParams(
            dimension_semantics=("parallel",),
        ),
        cost_estimate=cost,
    )(xp, p["w1"], p["b1"], p["w2"], p["b2"], p["w3"], p["b3"], p["w4"], p["b4"])

    # (n_tiles, tb) slab -> (B, 1); free layout plumbing outside the kernel.
    return out_slab.reshape(-1)[:B].reshape(B, 1)


def mlp_reference(x, params):
    h = jnp.maximum(x @ params["w1"] + params["b1"], 0.0)
    h = jnp.maximum(h @ params["w2"] + params["b2"], 0.0)
    h = jnp.maximum(h @ params["w3"] + params["b3"], 0.0)
    return h @ params["w4"] + params["b4"]


if __name__ == "__main__":
    key = jax.random.PRNGKey(0)
    key, kx = jax.random.split(key)
    params = init_params(key)

    # Small-shape correctness check (f32 weights, tight tolerance).
    B = 8
    x = jax.random.normal(kx, (B, D_IN), dtype=jnp.float32)
    out = jax.block_until_ready(mlp_forward(x, prepare_params(params, jnp.float32)))
    ref = mlp_reference(x, params)
    assert out.shape == (B, 1), out.shape
    assert jnp.allclose(out, ref, atol=1e-4, rtol=1e-4), "f32 small-batch mismatch"

    # Multi-tile grid + batch/K padding path (f32).
    key, kx2 = jax.random.split(key)
    B2 = 1000
    x2 = jax.random.normal(kx2, (B2, D_IN), dtype=jnp.float32)
    out2 = jax.block_until_ready(mlp_forward(x2, prepare_params(params, jnp.float32)))
    ref2 = mlp_reference(x2, params)
    assert out2.shape == (B2, 1), out2.shape
    assert jnp.allclose(out2, ref2, atol=1e-4, rtol=1e-4), "f32 multi-tile mismatch"

    # bf16-weight fast path (f32 accumulation) — loosened tolerance.
    out_bf16 = jax.block_until_ready(
        mlp_forward(x2, prepare_params(params, jnp.bfloat16)))
    assert out_bf16.shape == (B2, 1), out_bf16.shape
    assert jnp.allclose(out_bf16, ref2, atol=8e-2, rtol=8e-2), "bf16 path mismatch"

    print("KERNEL_OK")
</pallas_src>

<mosaic_0001>
module attributes {stable_mosaic.version = 11 : i64} {
  func.func @mlp_kernel(%arg0: i32, %arg1: memref<128x256xf32, #tpu.memory_space<vmem>>, %arg2: memref<256x360xf32, #tpu.memory_space<vmem>>, %arg3: memref<1x360xf32, #tpu.memory_space<vmem>>, %arg4: memref<360x360xf32, #tpu.memory_space<vmem>>, %arg5: memref<1x360xf32, #tpu.memory_space<vmem>>, %arg6: memref<360x128xf32, #tpu.memory_space<vmem>>, %arg7: memref<1x128xf32, #tpu.memory_space<vmem>>, %arg8: memref<1x128xf32, #tpu.memory_space<vmem>>, %arg9: memref<1x1xf32, #tpu.memory_space<vmem>>, %arg10: memref<1x128xf32, #tpu.memory_space<vmem>>) attributes {dimension_semantics = [#tpu.dimension_semantics<parallel>], iteration_bounds = array<i64: 1>, scalar_prefetch = 0 : i64, scratch_operands = 0 : i64, tpu.core_type = #tpu.core_type<tc>, window_params = [{transform_indices = @transform_0, window_bounds = array<i64: 128, 256>}, {pipeline_mode = #tpu.pipeline_mode<synchronous>, transform_indices = @transform_1, window_bounds = array<i64: 256, 360>}, {pipeline_mode = #tpu.pipeline_mode<synchronous>, transform_indices = @transform_2, window_bounds = array<i64: 1, 360>}, {pipeline_mode = #tpu.pipeline_mode<synchronous>, transform_indices = @transform_3, window_bounds = array<i64: 360, 360>}, {pipeline_mode = #tpu.pipeline_mode<synchronous>, transform_indices = @transform_4, window_bounds = array<i64: 1, 360>}, {pipeline_mode = #tpu.pipeline_mode<synchronous>, transform_indices = @transform_5, window_bounds = array<i64: 360, 128>}, {pipeline_mode = #tpu.pipeline_mode<synchronous>, transform_indices = @transform_6, window_bounds = array<i64: 1, 128>}, {pipeline_mode = #tpu.pipeline_mode<synchronous>, transform_indices = @transform_7, window_bounds = array<i64: 1, 128>}, {pipeline_mode = #tpu.pipeline_mode<synchronous>, transform_indices = @transform_8, window_bounds = array<i64: 1, 1>}, {transform_indices = @transform_9, window_bounds = array<i64: 1, 128>}]} {
    %c0 = arith.constant 0 : index
    %c0_0 = arith.constant 0 : index
    %0 = vector.load %arg1[%c0, %c0_0] : memref<128x256xf32, #tpu.memory_space<vmem>>, vector<128x256xf32>
    %c0_1 = arith.constant 0 : index
    %c0_2 = arith.constant 0 : index
    %1 = vector.load %arg2[%c0_1, %c0_2] : memref<256x360xf32, #tpu.memory_space<vmem>>, vector<256x360xf32>
    %cst = arith.constant dense<0.000000e+00> : vector<128x360xf32>
    %2 = tpu.matmul %0, %1, %cst {dimension_numbers = #tpu.dot_dimension_numbers<[1], [0], [0], [1], [0, 0, 1, 1], [], []>} : vector<128x256xf32>, vector<256x360xf32>, vector<128x360xf32> -> vector<128x360xf32>
    %c0_3 = arith.constant 0 : index
    %c0_4 = arith.constant 0 : index
    %3 = vector.load %arg3[%c0_3, %c0_4] : memref<1x360xf32, #tpu.memory_space<vmem>>, vector<1x360xf32>
    %4 = vector.broadcast %3 : vector<1x360xf32> to vector<128x360xf32>
    %5 = arith.addf %2, %4 : vector<128x360xf32>
    %cst_5 = arith.constant 0.000000e+00 : f32
    %6 = vector.broadcast %cst_5 : f32 to vector<128x360xf32>
    %7 = arith.maximumf %5, %6 : vector<128x360xf32>
    %c0_6 = arith.constant 0 : index
    %c0_7 = arith.constant 0 : index
    %8 = vector.load %arg4[%c0_6, %c0_7] : memref<360x360xf32, #tpu.memory_space<vmem>>, vector<360x360xf32>
    %cst_8 = arith.constant dense<0.000000e+00> : vector<128x360xf32>
    %9 = tpu.matmul %7, %8, %cst_8 {dimension_numbers = #tpu.dot_dimension_numbers<[1], [0], [0], [1], [0, 0, 1, 1], [], []>} : vector<128x360xf32>, vector<360x360xf32>, vector<128x360xf32> -> vector<128x360xf32>
    %c0_9 = arith.constant 0 : index
    %c0_10 = arith.constant 0 : index
    %10 = vector.load %arg5[%c0_9, %c0_10] : memref<1x360xf32, #tpu.memory_space<vmem>>, vector<1x360xf32>
    %11 = vector.broadcast %10 : vector<1x360xf32> to vector<128x360xf32>
    %12 = arith.addf %9, %11 : vector<128x360xf32>
    %cst_11 = arith.constant 0.000000e+00 : f32
    %13 = vector.broadcast %cst_11 : f32 to vector<128x360xf32>
    %14 = arith.maximumf %12, %13 : vector<128x360xf32>
    %c0_12 = arith.constant 0 : index
    %c0_13 = arith.constant 0 : index
    %15 = vector.load %arg6[%c0_12, %c0_13] : memref<360x128xf32, #tpu.memory_space<vmem>>, vector<360x128xf32>
    %cst_14 = arith.constant dense<0.000000e+00> : vector<128x128xf32>
    %16 = tpu.matmul %14, %15, %cst_14 {dimension_numbers = #tpu.dot_dimension_numbers<[1], [0], [0], [1], [0, 0, 1, 1], [], []>} : vector<128x360xf32>, vector<360x128xf32>, vector<128x128xf32> -> vector<128x128xf32>
    %c0_15 = arith.constant 0 : index
    %c0_16 = arith.constant 0 : index
    %17 = vector.load %arg7[%c0_15, %c0_16] : memref<1x128xf32, #tpu.memory_space<vmem>>, vector<1x128xf32>
    %18 = vector.broadcast %17 : vector<1x128xf32> to vector<128x128xf32>
    %19 = arith.addf %16, %18 : vector<128x128xf32>
    %cst_17 = arith.constant 0.000000e+00 : f32
    %20 = vector.broadcast %cst_17 : f32 to vector<128x128xf32>
    %21 = arith.maximumf %19, %20 : vector<128x128xf32>
    %c0_18 = arith.constant 0 : index
    %c0_19 = arith.constant 0 : index
    %22 = vector.load %arg8[%c0_18, %c0_19] : memref<1x128xf32, #tpu.memory_space<vmem>>, vector<1x128xf32>
    %cst_20 = arith.constant dense<0.000000e+00> : vector<1x128xf32>
    %23 = tpu.matmul %22, %21, %cst_20 {dimension_numbers = #tpu.dot_dimension_numbers<[1], [1], [0], [0], [0, 0, 1, 0], [], []>} : vector<1x128xf32>, vector<128x128xf32>, vector<1x128xf32> -> vector<1x128xf32>
    %c0_21 = arith.constant 0 : index
    %c0_22 = arith.constant 0 : index
    %24 = vector.load %arg9[%c0_21, %c0_22] : memref<1x1xf32, #tpu.memory_space<vmem>>, vector<1x1xf32>
    %25 = vector.broadcast %24 : vector<1x1xf32> to vector<1x128xf32>
    %26 = arith.addf %23, %25 : vector<1x128xf32>
    %c0_23 = arith.constant 0 : index
    %c0_24 = arith.constant 0 : index
    %27 = vector.load %arg10[%c0_23, %c0_24] : memref<1x128xf32, #tpu.memory_space<vmem>>, vector<1x128xf32>
    tpu.vector_store %arg10[%c0_23, %c0_24], %26 {strides = array<i32>} : memref<1x128xf32, #tpu.memory_space<vmem>>, vector<1x128xf32>,
    return
  }
  func.func @transform_0(%arg0: i32) -> (i32, i32) {
    %c0_i32 = arith.constant 0 : i32
    %c0_i32_0 = arith.constant 0 : i32
    return %arg0, %c0_i32 : i32, i32
  }
  func.func @transform_1(%arg0: i32) -> (i32, i32) {
    %c0_i32 = arith.constant 0 : i32
    %c0_i32_0 = arith.constant 0 : i32
    %c0_i32_1 = arith.constant 0 : i32
    return %c0_i32, %c0_i32_0 : i32, i32
  }
  func.func @transform_2(%arg0: i32) -> (i32, i32) {
    %c0_i32 = arith.constant 0 : i32
    %c0_i32_0 = arith.constant 0 : i32
    %c0_i32_1 = arith.constant 0 : i32
    return %c0_i32, %c0_i32_0 : i32, i32
  }
  func.func @transform_3(%arg0: i32) -> (i32, i32) {
    %c0_i32 = arith.constant 0 : i32
    %c0_i32_0 = arith.constant 0 : i32
    %c0_i32_1 = arith.constant 0 : i32
    return %c0_i32, %c0_i32_0 : i32, i32
  }
  func.func @transform_4(%arg0: i32) -> (i32, i32) {
    %c0_i32 = arith.constant 0 : i32
    %c0_i32_0 = arith.constant 0 : i32
    %c0_i32_1 = arith.constant 0 : i32
    return %c0_i32, %c0_i32_0 : i32, i32
  }
  func.func @transform_5(%arg0: i32) -> (i32, i32) {
    %c0_i32 = arith.constant 0 : i32
    %c0_i32_0 = arith.constant 0 : i32
    %c0_i32_1 = arith.constant 0 : i32
    return %c0_i32, %c0_i32_0 : i32, i32
  }
  func.func @transform_6(%arg0: i32) -> (i32, i32) {
    %c0_i32 = arith.constant 0 : i32
    %c0_i32_0 = arith.constant 0 : i32
    %c0_i32_1 = arith.constant 0 : i32
    return %c0_i32, %c0_i32_0 : i32, i32
  }
  func.func @transform_7(%arg0: i32) -> (i32, i32) {
    %c0_i32 = arith.constant 0 : i32
    %c0_i32_0 = arith.constant 0 : i32
    %c0_i32_1 = arith.constant 0 : i32
    return %c0_i32, %c0_i32_0 : i32, i32
  }
  func.func @transform_8(%arg0: i32) -> (i32, i32) {
    %c0_i32 = arith.constant 0 : i32
    %c0_i32_0 = arith.constant 0 : i32
    %c0_i32_1 = arith.constant 0 : i32
    return %c0_i32, %c0_i32_0 : i32, i32
  }
  func.func @transform_9(%arg0: i32) -> (i32, i32) {
    %c0_i32 = arith.constant 0 : i32
    %c0_i32_0 = arith.constant 0 : i32
    return %arg0, %c0_i32 : i32, i32
  }
}

</mosaic_0001>

<llo_original>
// kernel: tpu_custom_call.1
$region0: #{tpu_custom_call.1}
  #allocation0 [shape = 'u32[]', space=smem, size = 0x4, offset = 0x4, fixed_abs, tag = 'smem constant byte address 0x4 - core index']
  #allocation1 [shape = 'u32[144,128]{1,0:T(1,128)}', space=vmem, size = 0x12000, scoped, tag = 'internal scratch']
  #allocation2 [shape = 'f32[1,1]{1,0:T(1,128)S(1)}', space=vmem, size = 0x200, scoped, tag = 'scoped memory for tpu_custom_call.1']
  %s0 = inlined_call_operand.hbm [shape: f32[128,256], index: 0, kind: input, shape index: {}]
  %s1 = inlined_call_operand.vmem [shape: f32[256,360], index: 1, kind: input, shape index: {}]
  %s2 = inlined_call_operand.vmem [shape: f32[1,360], index: 2, kind: input, shape index: {}]
  %s3 = inlined_call_operand.vmem [shape: f32[360,360], index: 3, kind: input, shape index: {}]
  %s4 = inlined_call_operand.vmem [shape: f32[1,360], index: 4, kind: input, shape index: {}]
  %s5 = inlined_call_operand.vmem [shape: f32[360,128], index: 5, kind: input, shape index: {}]
  %s6 = inlined_call_operand.vmem [shape: f32[1,128], index: 6, kind: input, shape index: {}]
  %s7 = inlined_call_operand.vmem [shape: f32[1,128], index: 7, kind: input, shape index: {}]
  %s8 = inlined_call_operand.<no memory space> [shape: f32[1,1], index: 8, kind: input, shape index: {}]
  %s9 = inlined_call_operand.hbm [shape: f32[1,128], index: 9, kind: output, shape index: {}]
  %s10 = sld [smem:[#allocation0]]
  $region50: #{tpu_custom_call.1} parent=0
    _
  %s12 = ssub.s32 1, %s10
  %s13 = scalar_select 0, %s12, %s10
  %v14 = vstv %s8
  %15 = vst [vmem:[#allocation2] sm:$0x1] %v14
  $region1: #{tpu_custom_call.1} parent=0
    #allocation3 [shape = 'u8[131072]{0}', space=vmem, size = 0x20000, scoped, tag = 'input window, operand 0, single buffered']
    #allocation4 [shape = 's32[1]{0}', space=sflag, size = 0x4, scoped, tag = 'scoped memory for tpu_custom_call.1']
    #allocation5 [shape = 's32[1]{0}', space=sflag, size = 0x4, scoped, tag = 'scoped memory for tpu_custom_call.1']
    #allocation6 [shape = 'u8[512]{0}', space=vmem, size = 0x400, scoped, tag = 'output window, operand 0, single buffered']
    %16 = vsyncpa [#allocation4], 0
    %17 = vsyncpa [#allocation5], 0
    // Predicated region
    $region2: #{tpu_custom_call.1} parent=1 // pred_check
      _
    $region3: #{tpu_custom_call.1} parent=1 // pred_check_branch
      %19 = sbr.rel (0) target = $region5
    $region4: #{tpu_custom_call.1} parent=1 // pred_region
      %s21 = ssub.s32 4096, 4096
      %22 = vsyncadd [#allocation4], %s21
      %s23 = sshll.u32 [#allocation3], 4
      %s24 = int_to_ptr.vmem [resolvable:$true] %s23
      %29 = dma.hbm_to_vmem [thread:$0]  %s0, 4096, %s24, [#allocation4], 256, 256, 16
    $region5: #{tpu_custom_call.1} parent=1 // pred_fallthru
      _
    // Predicated region
    $region6: #{tpu_custom_call.1} parent=1 // pred_check
      _
    $region7: #{tpu_custom_call.1} parent=1 // pred_check_branch
      %31 = sbr.rel (0) target = $region9
    $region8: #{tpu_custom_call.1} parent=1 // pred_region
      _
    $region9: #{tpu_custom_call.1} parent=1 // pred_fallthru
      _
    // Predicated region
    $region10: #{tpu_custom_call.1} parent=1 // pred_check
      _
    $region11: #{tpu_custom_call.1} parent=1 // pred_check_branch
      %33 = sbr.rel (0) target = $region13
    $region12: #{tpu_custom_call.1} parent=1 // pred_region
      _
    $region13: #{tpu_custom_call.1} parent=1 // pred_fallthru
      _
    // Predicated region
    $region14: #{tpu_custom_call.1} parent=1 // pred_check
      _
    $region15: #{tpu_custom_call.1} parent=1 // pred_check_branch
      %35 = sbr.rel (0) target = $region17
    $region16: #{tpu_custom_call.1} parent=1 // pred_region
      _
    $region17: #{tpu_custom_call.1} parent=1 // pred_fallthru
      _
    // Predicated region
    $region18: #{tpu_custom_call.1} parent=1 // pred_check
      _
    $region19: #{tpu_custom_call.1} parent=1 // pred_check_branch
      %37 = sbr.rel (0) target = $region21
    $region20: #{tpu_custom_call.1} parent=1 // pred_region
      _
    $region21: #{tpu_custom_call.1} parent=1 // pred_fallthru
      _
    // Predicated region
    $region22: #{tpu_custom_call.1} parent=1 // pred_check
      _
    $region23: #{tpu_custom_call.1} parent=1 // pred_check_branch
      %39 = sbr.rel (0) target = $region25
    $region24: #{tpu_custom_call.1} parent=1 // pred_region
      _
    $region25: #{tpu_custom_call.1} parent=1 // pred_fallthru
      _
    // Predicated region
    $region26: #{tpu_custom_call.1} parent=1 // pred_check
      _
    $region27: #{tpu_custom_call.1} parent=1 // pred_check_branch
      %41 = sbr.rel (0) target = $region29
    $region28: #{tpu_custom_call.1} parent=1 // pred_region
      _
    $region29: #{tpu_custom_call.1} parent=1 // pred_fallthru
      _
    // Predicated region
    $region30: #{tpu_custom_call.1} parent=1 // pred_check
      _
    $region31: #{tpu_custom_call.1} parent=1 // pred_check_branch
      %43 = sbr.rel (0) target = $region33
    $region32: #{tpu_custom_call.1} parent=1 // pred_region
      _
    $region33: #{tpu_custom_call.1} parent=1 // pred_fallthru
      _
    // Predicated region
    $region34: #{tpu_custom_call.1} parent=1 // pred_check
      _
    $region35: #{tpu_custom_call.1} parent=1 // pred_check_branch
      %45 = sbr.rel (0) target = $region37
    $region36: #{tpu_custom_call.1} parent=1 // pred_region
      _
    $region37: #{tpu_custom_call.1} parent=1 // pred_fallthru
      _
    // Predicated region
    $region38: #{tpu_custom_call.1} parent=1 // pred_check
      _
    $region39: #{tpu_custom_call.1} parent=1 // pred_check_branch
      %47 = sbr.rel (0) target = $region41
    $region40: #{tpu_custom_call.1} parent=1 // pred_region
      %48 = dma.done [#allocation4], 4096
    $region41: #{tpu_custom_call.1} parent=1 // pred_fallthru
      _
    %v49 = vld [vmem:[#allocation3] sm:$0xff]
    %v50 = vld [vmem:[#allocation3 + $0x8] sm:$0xff]
    %v51 = vld [vmem:[#allocation3 + $0x10] sm:$0xff]
    %v52 = vld [vmem:[#allocation3 + $0x18] sm:$0xff]
    %v53 = vld [vmem:[#allocation3 + $0x20] sm:$0xff]
    %v54 = vld [vmem:[#allocation3 + $0x28] sm:$0xff]
    %v55 = vld [vmem:[#allocation3 + $0x30] sm:$0xff]
    %v56 = vld [vmem:[#allocation3 + $0x38] sm:$0xff]
    %v57 = vld [vmem:[#allocation3 + $0x40] sm:$0xff]
    %v58 = vld [vmem:[#allocation3 + $0x48] sm:$0xff]
    %v59 = vld [vmem:[#allocation3 + $0x50] sm:$0xff]
    %v60 = vld [vmem:[#allocation3 + $0x58] sm:$0xff]
    %v61 = vld [vmem:[#allocation3 + $0x60] sm:$0xff]
    %v62 = vld [vmem:[#allocation3 + $0x68] sm:$0xff]
    %v63 = vld [vmem:[#allocation3 + $0x70] sm:$0xff]
    %v64 = vld [vmem:[#allocation3 + $0x78] sm:$0xff]
    %v65 = vld [vmem:[#allocation3 + $0x80] sm:$0xff]
    %v66 = vld [vmem:[#allocation3 + $0x88] sm:$0xff]
    %v67 = vld [vmem:[#allocation3 + $0x90] sm:$0xff]
    %v68 = vld [vmem:[#allocation3 + $0x98] sm:$0xff]
    %v69 = vld [vmem:[#allocation3 + $0xa0] sm:$0xff]
    %v70 = vld [vmem:[#allocation3 + $0xa8] sm:$0xff]
    %v71 = vld [vmem:[#allocation3 + $0xb0] sm:$0xff]
    %v72 = vld [vmem:[#allocation3 + $0xb8] sm:$0xff]
    %v73 = vld [vmem:[#allocation3 + $0xc0] sm:$0xff]
    %v74 = vld [vmem:[#allocation3 + $0xc8] sm:$0xff]
    %v75 = vld [vmem:[#allocation3 + $0xd0] sm:$0xff]
    %v76 = vld [vmem:[#allocation3 + $0xd8] sm:$0xff]
    %v77 = vld [vmem:[#allocation3 + $0xe0] sm:$0xff]
    %v78 = vld [vmem:[#allocation3 + $0xe8] sm:$0xff]
    %v79 = vld [vmem:[#allocation3 + $0xf0] sm:$0xff]
    %v80 = vld [vmem:[#allocation3 + $0xf8] sm:$0xff]
    %v81 = vld [vmem:[%s1] sm:$0xff]
    %v82 = vld [vmem:[%s1 + $0x8] sm:$0xff]
    %v83 = vld [vmem:[%s1 + $0x10] sm:$0xff]
    %v84 = vld [vmem:[%s1 + $0x18] sm:$0xff]
    %v85 = vld [vmem:[%s1 + $0x20] sm:$0xff]
    %v86 = vld [vmem:[%s1 + $0x28] sm:$0xff]
    %v87 = vld [vmem:[%s1 + $0x30] sm:$0xff]
    %v88 = vld [vmem:[%s1 + $0x38] sm:$0xff]
    %v89 = vld [vmem:[%s1 + $0x40] sm:$0xff]
    %v90 = vld [vmem:[%s1 + $0x48] sm:$0xff]
    %v91 = vld [vmem:[%s1 + $0x50] sm:$0xff]
    %v92 = vld [vmem:[%s1 + $0x58] sm:$0xff]
    %v93 = vld [vmem:[%s1 + $0x60] sm:$0xff]
    %v94 = vld [vmem:[%s1 + $0x68] sm:$0xff]
    %v95 = vld [vmem:[%s1 + $0x70] sm:$0xff]
    %v96 = vld [vmem:[%s1 + $0x78] sm:$0xff]
    %v97 = vld [vmem:[%s1 + $0x80] sm:$0xff]
    %v98 = vld [vmem:[%s1 + $0x88] sm:$0xff]
    %v99 = vld [vmem:[%s1 + $0x90] sm:$0xff]
    %v100 = vld [vmem:[%s1 + $0x98] sm:$0xff]
    %v101 = vld [vmem:[%s1 + $0xa0] sm:$0xff]
    %v102 = vld [vmem:[%s1 + $0xa8] sm:$0xff]
    %v103 = vld [vmem:[%s1 + $0xb0] sm:$0xff]
    %v104 = vld [vmem:[%s1 + $0xb8] sm:$0xff]
    %v105 = vld [vmem:[%s1 + $0xc0] sm:$0xff]
    %v106 = vld [vmem:[%s1 + $0xc8] sm:$0xff]
    %v107 = vld [vmem:[%s1 + $0xd0] sm:$0xff]
    %v108 = vld [vmem:[%s1 + $0xd8] sm:$0xff]
    %v109 = vld [vmem:[%s1 + $0xe0] sm:$0xff]
    %v110 = vld [vmem:[%s1 + $0xe8] sm:$0xff]
    %v111 = vld [vmem:[%s1 + $0xf0] sm:$0xff]
    %v112 = vld [vmem:[%s1 + $0xf8] sm:$0xff]
    %v113 = vld [vmem:[%s1 + $0x100] sm:$0xff]
    %v114 = vld [vmem:[%s1 + $0x108] sm:$0xff]
    %v115 = vld [vmem:[%s1 + $0x110] sm:$0xff]
    %v116 = vld [vmem:[%s1 + $0x118] sm:$0xff]
    %v117 = vld [vmem:[%s1 + $0x120] sm:$0xff]
    %v118 = vld [vmem:[%s1 + $0x128] sm:$0xff]
    %v119 = vld [vmem:[%s1 + $0x130] sm:$0xff]
    %v120 = vld [vmem:[%s1 + $0x138] sm:$0xff]
    %v121 = vld [vmem:[%s1 + $0x140] sm:$0xff]
    %v122 = vld [vmem:[%s1 + $0x148] sm:$0xff]
    %v123 = vld [vmem:[%s1 + $0x150] sm:$0xff]
    %v124 = vld [vmem:[%s1 + $0x158] sm:$0xff]
    %v125 = vld [vmem:[%s1 + $0x160] sm:$0xff]
    %v126 = vld [vmem:[%s1 + $0x168] sm:$0xff]
    %v127 = vld [vmem:[%s1 + $0x170] sm:$0xff]
    %v128 = vld [vmem:[%s1 + $0x178] sm:$0xff]
    %v129 = vld [vmem:[%s1 + $0x180] sm:$0xff]
    %v130 = vld [vmem:[%s1 + $0x188] sm:$0xff]
    %v131 = vld [vmem:[%s1 + $0x190] sm:$0xff]
    %v132 = vld [vmem:[%s1 + $0x198] sm:$0xff]
    %v133 = vld [vmem:[%s1 + $0x1a0] sm:$0xff]
    %v134 = vld [vmem:[%s1 + $0x1a8] sm:$0xff]
    %v135 = vld [vmem:[%s1 + $0x1b0] sm:$0xff]
    %v136 = vld [vmem:[%s1 + $0x1b8] sm:$0xff]
    %v137 = vld [vmem:[%s1 + $0x1c0] sm:$0xff]
    %v138 = vld [vmem:[%s1 + $0x1c8] sm:$0xff]
    %v139 = vld [vmem:[%s1 + $0x1d0] sm:$0xff]
    %v140 = vld [vmem:[%s1 + $0x1d8] sm:$0xff]
    %v141 = vld [vmem:[%s1 + $0x1e0] sm:$0xff]
    %v142 = vld [vmem:[%s1 + $0x1e8] sm:$0xff]
    %v143 = vld [vmem:[%s1 + $0x1f0] sm:$0xff]
    %v144 = vld [vmem:[%s1 + $0x1f8] sm:$0xff]
    %v145 = vld [vmem:[%s1 + $0x200] sm:$0xff]
    %v146 = vld [vmem:[%s1 + $0x208] sm:$0xff]
    %v147 = vld [vmem:[%s1 + $0x210] sm:$0xff]
    %v148 = vld [vmem:[%s1 + $0x218] sm:$0xff]
    %v149 = vld [vmem:[%s1 + $0x220] sm:$0xff]
    %v150 = vld [vmem:[%s1 + $0x228] sm:$0xff]
    %v151 = vld [vmem:[%s1 + $0x230] sm:$0xff]
    %v152 = vld [vmem:[%s1 + $0x238] sm:$0xff]
    %v153 = vld [vmem:[%s1 + $0x240] sm:$0xff]
    %v154 = vld [vmem:[%s1 + $0x248] sm:$0xff]
    %v155 = vld [vmem:[%s1 + $0x250] sm:$0xff]
    %v156 = vld [vmem:[%s1 + $0x258] sm:$0xff]
    %v157 = vld [vmem:[%s1 + $0x260] sm:$0xff]
    %v158 = vld [vmem:[%s1 + $0x268] sm:$0xff]
    %v159 = vld [vmem:[%s1 + $0x270] sm:$0xff]
    %v160 = vld [vmem:[%s1 + $0x278] sm:$0xff]
    %v161 = vld [vmem:[%s1 + $0x280] sm:$0xff]
    %v162 = vld [vmem:[%s1 + $0x288] sm:$0xff]
    %v163 = vld [vmem:[%s1 + $0x290] sm:$0xff]
    %v164 = vld [vmem:[%s1 + $0x298] sm:$0xff]
    %v165 = vld [vmem:[%s1 + $0x2a0] sm:$0xff]
    %v166 = vld [vmem:[%s1 + $0x2a8] sm:$0xff]
    %v167 = vld [vmem:[%s1 + $0x2b0] sm:$0xff]
    %v168 = vld [vmem:[%s1 + $0x2b8] sm:$0xff]
    %v169 = vld [vmem:[%s1 + $0x2c0] sm:$0xff]
    %v170 = vld [vmem:[%s1 + $0x2c8] sm:$0xff]
    %v171 = vld [vmem:[%s1 + $0x2d0] sm:$0xff]
    %v172 = vld [vmem:[%s1 + $0x2d8] sm:$0xff]
    %v173 = vld [vmem:[%s1 + $0x2e0] sm:$0xff]
    %v174 = vld [vmem:[%s1 + $0x2e8] sm:$0xff]
    %v175 = vld [vmem:[%s1 + $0x2f0] sm:$0xff]
    %v176 = vld [vmem:[%s1 + $0x2f8] sm:$0xff]
    %v177 = vld [vmem:[%s2] sm:$0x7]
    %v179 = vlaneseq
    %v180 = vshrl.u32 %v179, 7
    %v181 = vsub.s32 0, %v180
    %v182 = vrot.slane %v177, %v181
    %v183 = vlaneseq
    %v184 = vshrl.u32 %v183, 7
    %v185 = vsub.s32 1, %v184
    %v186 = vrot.slane %v177, %v185
    %v187 = vlaneseq
    %v188 = vshrl.u32 %v187, 7
    %v189 = vsub.s32 2, %v188
    %v190 = vrot.slane %v177, %v189
    %194 = vmatprep.subr.mxu0 %v127
    %195 = vmatpush1.msra.mxu0 %v126
    %196 = vmatprep.subr.mxu0 %v124
    %197 = vmatpush1.msra.mxu0 %v123
    %198 = vmatprep.subr.mxu0 %v121
    %199 = vmatpush1.msra.mxu0 %v120
    %200 = vmatprep.subr.mxu0 %v118
    %201 = vmatpush1.msra.mxu0 %v117
    %202 = vmatprep.subr.mxu0 %v115
    %203 = vmatpush1.msra.mxu0 %v114
    %204 = vmatprep.subr.mxu0 %v112
    %205 = vmatpush1.msra.mxu0 %v111
    %206 = vmatprep.subr.mxu0 %v109
    %207 = vmatpush1.msra.mxu0 %v108
    %208 = vmatprep.subr.mxu0 %v106
    %209 = vmatpush1.msra.mxu0 %v105
    %210 = vmatprep.subr.mxu0 %v103
    %211 = vmatpush1.msra.mxu0 %v102
    %212 = vmatprep.subr.mxu0 %v100
    %213 = vmatpush1.msra.mxu0 %v99
    %214 = vmatprep.subr.mxu0 %v97
    %215 = vmatpush1.msra.mxu0 %v96
    %216 = vmatprep.subr.mxu0 %v94
    %217 = vmatpush1.msra.mxu0 %v93
    %218 = vmatprep.subr.mxu0 %v91
    %219 = vmatpush1.msra.mxu0 %v90
    %220 = vmatprep.subr.mxu0 %v88
    %221 = vmatpush1.msra.mxu0 %v87
    %222 = vmatprep.subr.mxu0 %v85
    %223 = vmatpush1.msra.mxu0 %v84
    %224 = vmatprep.subr.mxu0 %v82
    %225 = vmatpush1.msra.mxu0 %v81
    %226 = vmatprep.subr.mxu0 %v175
    %227 = vmatpush2.msra.mxu0 %v174
    %228 = vmatprep.subr.mxu0 %v172
    %229 = vmatpush2.msra.mxu0 %v171
    %230 = vmatprep.subr.mxu0 %v169
    %231 = vmatpush2.msra.mxu0 %v168
    %232 = vmatprep.subr.mxu0 %v166
    %233 = vmatpush2.msra.mxu0 %v165
    %234 = vmatprep.subr.mxu0 %v163
    %235 = vmatpush2.msra.mxu0 %v162
    %236 = vmatprep.subr.mxu0 %v160
    %237 = vmatpush2.msra.mxu0 %v159
    %238 = vmatprep.subr.mxu0 %v157
    %239 = vmatpush2.msra.mxu0 %v156
    %240 = vmatprep.subr.mxu0 %v154
    %241 = vmatpush2.msra.mxu0 %v153
    %242 = vmatprep.subr.mxu0 %v151
    %243 = vmatpush2.msra.mxu0 %v150
    %244 = vmatprep.subr.mxu0 %v148
    %245 = vmatpush2.msra.mxu0 %v147
    %246 = vmatprep.subr.mxu0 %v145
    %247 = vmatpush2.msra.mxu0 %v144
    %248 = vmatprep.subr.mxu0 %v142
    %249 = vmatpush2.msra.mxu0 %v141
    %250 = vmatprep.subr.mxu0 %v139
    %251 = vmatpush2.msra.mxu0 %v138
    %252 = vmatprep.subr.mxu0 %v136
    %253 = vmatpush2.msra.mxu0 %v135
    %254 = vmatprep.subr.mxu0 %v133
    %255 = vmatpush2.msra.mxu0 %v132
    %256 = vmatprep.subr.mxu0 %v130
    %257 = vmatpush2.msra.mxu0 %v129
    %258 = vmatprep.mubr.f32.mxu0 %v50
    %259 = vmatmul.mubr.f32.gmra.mxu0 %v49
    %v260 = vpop.f32.mrf.mxu0
    %v261 = vadd.f32 %v182, %v260
    %v262 = vpop.f32.mrf.mxu0
    %v263 = vadd.f32 %v186, %v262
    %264 = vmatprep.mubr.f32.mxu0 %v52
    %265 = vmatmul.mubr.f32.gmra.mxu0 %v51
    %v266 = vpop.f32.mrf.mxu0
    %v267 = vadd.f32 %v182, %v266
    %v268 = vpop.f32.mrf.mxu0
    %v269 = vadd.f32 %v186, %v268
    %270 = vmatprep.mubr.f32.mxu0 %v54
    %271 = vmatmul.mubr.f32.gmra.mxu0 %v53
    %v272 = vpop.f32.mrf.mxu0
    %v273 = vadd.f32 %v182, %v272
    %v274 = vpop.f32.mrf.mxu0
    %v275 = vadd.f32 %v186, %v274
    %276 = vmatprep.mubr.f32.mxu0 %v56
    %277 = vmatmul.mubr.f32.gmra.mxu0 %v55
    %v278 = vpop.f32.mrf.mxu0
    %v279 = vadd.f32 %v182, %v278
    %v280 = vpop.f32.mrf.mxu0
    %v281 = vadd.f32 %v186, %v280
    %282 = vmatprep.mubr.f32.mxu0 %v58
    %283 = vmatmul.mubr.f32.gmra.mxu0 %v57
    %v284 = vpop.f32.mrf.mxu0
    %v285 = vadd.f32 %v182, %v284
    %v286 = vpop.f32.mrf.mxu0
    %v287 = vadd.f32 %v186, %v286
    %288 = vmatprep.mubr.f32.mxu0 %v60
    %289 = vmatmul.mubr.f32.gmra.mxu0 %v59
    %v290 = vpop.f32.mrf.mxu0
    %v291 = vadd.f32 %v182, %v290
    %v292 = vpop.f32.mrf.mxu0
    %v293 = vadd.f32 %v186, %v292
    %294 = vmatprep.mubr.f32.mxu0 %v62
    %295 = vmatmul.mubr.f32.gmra.mxu0 %v61
    %v296 = vpop.f32.mrf.mxu0
    %v297 = vadd.f32 %v182, %v296
    %v298 = vpop.f32.mrf.mxu0
    %v299 = vadd.f32 %v186, %v298
    %300 = vmatprep.mubr.f32.mxu0 %v64
    %301 = vmatmul.mubr.f32.gmra.mxu0 %v63
    %v302 = vpop.f32.mrf.mxu0
    %v303 = vadd.f32 %v182, %v302
    %v304 = vpop.f32.mrf.mxu0
    %v305 = vadd.f32 %v186, %v304
    %306 = vmatprep.mubr.f32.mxu0 %v66
    %307 = vmatmul.mubr.f32.gmra.mxu0 %v65
    %v308 = vpop.f32.mrf.mxu0
    %v309 = vadd.f32 %v182, %v308
    %v310 = vpop.f32.mrf.mxu0
    %v311 = vadd.f32 %v186, %v310
    %312 = vmatprep.mubr.f32.mxu0 %v68
    %313 = vmatmul.mubr.f32.gmra.mxu0 %v67
    %v314 = vpop.f32.mrf.mxu0
    %v315 = vadd.f32 %v182, %v314
    %v316 = vpop.f32.mrf.mxu0
    %v317 = vadd.f32 %v186, %v316
    %318 = vmatprep.mubr.f32.mxu0 %v70
    %319 = vmatmul.mubr.f32.gmra.mxu0 %v69
    %v320 = vpop.f32.mrf.mxu0
    %v321 = vadd.f32 %v182, %v320
    %v322 = vpop.f32.mrf.mxu0
    %v323 = vadd.f32 %v186, %v322
    %324 = vmatprep.mubr.f32.mxu0 %v72
    %325 = vmatmul.mubr.f32.gmra.mxu0 %v71
    %v326 = vpop.f32.mrf.mxu0
    %v327 = vadd.f32 %v182, %v326
    %v328 = vpop.f32.mrf.mxu0
    %v329 = vadd.f32 %v186, %v328
    %330 = vmatprep.mubr.f32.mxu0 %v74
    %331 = vmatmul.mubr.f32.gmra.mxu0 %v73
    %v332 = vpop.f32.mrf.mxu0
    %v333 = vadd.f32 %v182, %v332
    %v334 = vpop.f32.mrf.mxu0
    %v335 = vadd.f32 %v186, %v334
    %336 = vmatprep.mubr.f32.mxu0 %v76
    %337 = vmatmul.mubr.f32.gmra.mxu0 %v75
    %v338 = vpop.f32.mrf.mxu0
    %v339 = vadd.f32 %v182, %v338
    %v340 = vpop.f32.mrf.mxu0
    %v341 = vadd.f32 %v186, %v340
    %342 = vmatprep.mubr.f32.mxu0 %v78
    %343 = vmatmul.mubr.f32.gmra.mxu0 %v77
    %v344 = vpop.f32.mrf.mxu0
    %v345 = vadd.f32 %v182, %v344
    %v346 = vpop.f32.mrf.mxu0
    %v347 = vadd.f32 %v186, %v346
    %348 = vmatprep.mubr.f32.mxu0 %v80
    %349 = vmatmul.mubr.f32.gmra.mxu0 %v79
    %v350 = vpop.f32.mrf.mxu0
    %v351 = vadd.f32 %v182, %v350
    %v352 = vpop.f32.mrf.mxu0
    %v353 = vadd.f32 %v186, %v352
    %354 = vdwg.mxu0
    %355 = vmatprep.subr.mxu0 0.0
    %356 = vmatpush1.msra.mxu0 %v128
    %357 = vmatprep.subr.mxu0 0.0
    %358 = vmatpush1.msra.mxu0 %v125
    %359 = vmatprep.subr.mxu0 0.0
    %360 = vmatpush1.msra.mxu0 %v122
    %361 = vmatprep.subr.mxu0 0.0
    %362 = vmatpush1.msra.mxu0 %v119
    %363 = vmatprep.subr.mxu0 0.0
    %364 = vmatpush1.msra.mxu0 %v116
    %365 = vmatprep.subr.mxu0 0.0
    %366 = vmatpush1.msra.mxu0 %v113
    %367 = vmatprep.subr.mxu0 0.0
    %368 = vmatpush1.msra.mxu0 %v110
    %369 = vmatprep.subr.mxu0 0.0
    %370 = vmatpush1.msra.mxu0 %v107
    %371 = vmatprep.subr.mxu0 0.0
    %372 = vmatpush1.msra.mxu0 %v104
    %373 = vmatprep.subr.mxu0 0.0
    %374 = vmatpush1.msra.mxu0 %v101
    %375 = vmatprep.subr.mxu0 0.0
    %376 = vmatpush1.msra.mxu0 %v98
    %377 = vmatprep.subr.mxu0 0.0
    %378 = vmatpush1.msra.mxu0 %v95
    %379 = vmatprep.subr.mxu0 0.0
    %380 = vmatpush1.msra.mxu0 %v92
    %381 = vmatprep.subr.mxu0 0.0
    %382 = vmatpush1.msra.mxu0 %v89
    %383 = vmatprep.subr.mxu0 0.0
    %384 = vmatpush1.msra.mxu0 %v86
    %385 = vmatprep.subr.mxu0 0.0
    %386 = vmatpush1.msra.mxu0 %v83
    %387 = vmatprep.subr.mxu0 0.0
    %388 = vmatpush2.msra.mxu0 %v176
    %389 = vmatprep.subr.mxu0 0.0
    %390 = vmatpush2.msra.mxu0 %v173
    %391 = vmatprep.subr.mxu0 0.0
    %392 = vmatpush2.msra.mxu0 %v170
    %393 = vmatprep.subr.mxu0 0.0
    %394 = vmatpush2.msra.mxu0 %v167
    %395 = vmatprep.subr.mxu0 0.0
    %396 = vmatpush2.msra.mxu0 %v164
    %397 = vmatprep.subr.mxu0 0.0
    %398 = vmatpush2.msra.mxu0 %v161
    %399 = vmatprep.subr.mxu0 0.0
    %400 = vmatpush2.msra.mxu0 %v158
    %401 = vmatprep.subr.mxu0 0.0
    %402 = vmatpush2.msra.mxu0 %v155
    %403 = vmatprep.subr.mxu0 0.0
    %404 = vmatpush2.msra.mxu0 %v152
    %405 = vmatprep.subr.mxu0 0.0
    %406 = vmatpush2.msra.mxu0 %v149
    %407 = vmatprep.subr.mxu0 0.0
    %408 = vmatpush2.msra.mxu0 %v146
    %409 = vmatprep.subr.mxu0 0.0
    %410 = vmatpush2.msra.mxu0 %v143
    %411 = vmatprep.subr.mxu0 0.0
    %412 = vmatpush2.msra.mxu0 %v140
    %413 = vmatprep.subr.mxu0 0.0
    %414 = vmatpush2.msra.mxu0 %v137
    %415 = vmatprep.subr.mxu0 0.0
    %416 = vmatpush2.msra.mxu0 %v134
    %417 = vmatprep.subr.mxu0 0.0
    %418 = vmatpush2.msra.mxu0 %v131
    %419 = vmatprep.mubr.f32.mxu0 %v50
    %420 = vmatmul.mubr.f32.gmra.mxu0 %v49
    %v421 = vpop.f32.mrf.mxu0
    %v422 = vadd.f32 %v190, %v421
    %v423 = vpop.f32.mrf.mxu0
    %424 = vmatprep.mubr.f32.mxu0 %v52
    %425 = vmatmul.mubr.f32.gmra.mxu0 %v51
    %v426 = vpop.f32.mrf.mxu0
    %v427 = vadd.f32 %v190, %v426
    %v428 = vpop.f32.mrf.mxu0
    %429 = vmatprep.mubr.f32.mxu0 %v54
    %430 = vmatmul.mubr.f32.gmra.mxu0 %v53
    %v431 = vpop.f32.mrf.mxu0
    %v432 = vadd.f32 %v190, %v431
    %v433 = vpop.f32.mrf.mxu0
    %434 = vmatprep.mubr.f32.mxu0 %v56
    %435 = vmatmul.mubr.f32.gmra.mxu0 %v55
    %v436 = vpop.f32.mrf.mxu0
    %v437 = vadd.f32 %v190, %v436
    %v438 = vpop.f32.mrf.mxu0
    %439 = vmatprep.mubr.f32.mxu0 %v58
    %440 = vmatmul.mubr.f32.gmra.mxu0 %v57
    %v441 = vpop.f32.mrf.mxu0
    %v442 = vadd.f32 %v190, %v441
    %v443 = vpop.f32.mrf.mxu0
    %444 = vmatprep.mubr.f32.mxu0 %v60
    %445 = vmatmul.mubr.f32.gmra.mxu0 %v59
    %v446 = vpop.f32.mrf.mxu0
    %v447 = vadd.f32 %v190, %v446
    %v448 = vpop.f32.mrf.mxu0
    %449 = vmatprep.mubr.f32.mxu0 %v62
    %450 = vmatmul.mubr.f32.gmra.mxu0 %v61
    %v451 = vpop.f32.mrf.mxu0
    %v452 = vadd.f32 %v190, %v451
    %v453 = vpop.f32.mrf.mxu0
    %454 = vmatprep.mubr.f32.mxu0 %v64
    %455 = vmatmul.mubr.f32.gmra.mxu0 %v63
    %v456 = vpop.f32.mrf.mxu0
    %v457 = vadd.f32 %v190, %v456
    %v458 = vpop.f32.mrf.mxu0
    %459 = vmatprep.mubr.f32.mxu0 %v66
    %460 = vmatmul.mubr.f32.gmra.mxu0 %v65
    %v461 = vpop.f32.mrf.mxu0
    %v462 = vadd.f32 %v190, %v461
    %v463 = vpop.f32.mrf.mxu0
    %464 = vmatprep.mubr.f32.mxu0 %v68
    %465 = vmatmul.mubr.f32.gmra.mxu0 %v67
    %v466 = vpop.f32.mrf.mxu0
    %v467 = vadd.f32 %v190, %v466
    %v468 = vpop.f32.mrf.mxu0
    %469 = vmatprep.mubr.f32.mxu0 %v70
    %470 = vmatmul.mubr.f32.gmra.mxu0 %v69
    %v471 = vpop.f32.mrf.mxu0
    %v472 = vadd.f32 %v190, %v471
    %v473 = vpop.f32.mrf.mxu0
    %474 = vmatprep.mubr.f32.mxu0 %v72
    %475 = vmatmul.mubr.f32.gmra.mxu0 %v71
    %v476 = vpop.f32.mrf.mxu0
    %v477 = vadd.f32 %v190, %v476
    %v478 = vpop.f32.mrf.mxu0
    %479 = vmatprep.mubr.f32.mxu0 %v74
    %480 = vmatmul.mubr.f32.gmra.mxu0 %v73
    %v481 = vpop.f32.mrf.mxu0
    %v482 = vadd.f32 %v190, %v481
    %v483 = vpop.f32.mrf.mxu0
    %484 = vmatprep.mubr.f32.mxu0 %v76
    %485 = vmatmul.mubr.f32.gmra.mxu0 %v75
    %v486 = vpop.f32.mrf.mxu0
    %v487 = vadd.f32 %v190, %v486
    %v488 = vpop.f32.mrf.mxu0
    %489 = vmatprep.mubr.f32.mxu0 %v78
    %490 = vmatmul.mubr.f32.gmra.mxu0 %v77
    %v491 = vpop.f32.mrf.mxu0
    %v492 = vadd.f32 %v190, %v491
    %v493 = vpop.f32.mrf.mxu0
    %494 = vmatprep.mubr.f32.mxu0 %v80
    %495 = vmatmul.mubr.f32.gmra.mxu0 %v79
    %v496 = vpop.f32.mrf.mxu0
    %v497 = vadd.f32 %v190, %v496
    %v498 = vpop.f32.mrf.mxu0
    %499 = vdwg.mxu0
    %v500 = vmax.f32 %v261, 0.0
    %v501 = vmax.f32 %v263, 0.0
    %v502 = vmax.f32 %v422, 0.0
    %v503 = vmax.f32 %v267, 0.0
    %v504 = vmax.f32 %v269, 0.0
    %v505 = vmax.f32 %v427, 0.0
    %v506 = vmax.f32 %v273, 0.0
    %v507 = vmax.f32 %v275, 0.0
    %v508 = vmax.f32 %v432, 0.0
    %v509 = vmax.f32 %v279, 0.0
    %v510 = vmax.f32 %v281, 0.0
    %v511 = vmax.f32 %v437, 0.0
    %v512 = vmax.f32 %v285, 0.0
    %v513 = vmax.f32 %v287, 0.0
    %v514 = vmax.f32 %v442, 0.0
    %v515 = vmax.f32 %v291, 0.0
    %v516 = vmax.f32 %v293, 0.0
    %v517 = vmax.f32 %v447, 0.0
    %v518 = vmax.f32 %v297, 0.0
    %v519 = vmax.f32 %v299, 0.0
    %v520 = vmax.f32 %v452, 0.0
    %v521 = vmax.f32 %v303, 0.0
    %v522 = vmax.f32 %v305, 0.0
    %v523 = vmax.f32 %v457, 0.0
    %v524 = vmax.f32 %v309, 0.0
    %v525 = vmax.f32 %v311, 0.0
    %v526 = vmax.f32 %v462, 0.0
    %v527 = vmax.f32 %v315, 0.0
    %v528 = vmax.f32 %v317, 0.0
    %v529 = vmax.f32 %v467, 0.0
    %v530 = vmax.f32 %v321, 0.0
    %v531 = vmax.f32 %v323, 0.0
    %v532 = vmax.f32 %v472, 0.0
    %v533 = vmax.f32 %v327, 0.0
    %v534 = vmax.f32 %v329, 0.0
    %v535 = vmax.f32 %v477, 0.0
    %v536 = vmax.f32 %v333, 0.0
    %v537 = vmax.f32 %v335, 0.0
    %v538 = vmax.f32 %v482, 0.0
    %v539 = vmax.f32 %v339, 0.0
    %v540 = vmax.f32 %v341, 0.0
    %v541 = vmax.f32 %v487, 0.0
    %v542 = vmax.f32 %v345, 0.0
    %v543 = vmax.f32 %v347, 0.0
    %v544 = vmax.f32 %v492, 0.0
    %v545 = vmax.f32 %v351, 0.0
    %v546 = vmax.f32 %v353, 0.0
    %v547 = vmax.f32 %v497, 0.0
    %v548 = vld [vmem:[%s3] sm:$0xff]
    %v549 = vld [vmem:[%s3 + $0x8] sm:$0xff]
    %v550 = vld [vmem:[%s3 + $0x10] sm:$0xff]
    %v551 = vld [vmem:[%s3 + $0x18] sm:$0xff]
    %v552 = vld [vmem:[%s3 + $0x20] sm:$0xff]
    %v553 = vld [vmem:[%s3 + $0x28] sm:$0xff]
    %v554 = vld [vmem:[%s3 + $0x30] sm:$0xff]
    %v555 = vld [vmem:[%s3 + $0x38] sm:$0xff]
    %v556 = vld [vmem:[%s3 + $0x40] sm:$0xff]
    %v557 = vld [vmem:[%s3 + $0x48] sm:$0xff]
    %v558 = vld [vmem:[%s3 + $0x50] sm:$0xff]
    %v559 = vld [vmem:[%s3 + $0x58] sm:$0xff]
    %v560 = vld [vmem:[%s3 + $0x60] sm:$0xff]
    %v561 = vld [vmem:[%s3 + $0x68] sm:$0xff]
    %v562 = vld [vmem:[%s3 + $0x70] sm:$0xff]
    %v563 = vld [vmem:[%s3 + $0x78] sm:$0xff]
    %v564 = vld [vmem:[%s3 + $0x80] sm:$0xff]
    %v565 = vld [vmem:[%s3 + $0x88] sm:$0xff]
    %v566 = vld [vmem:[%s3 + $0x90] sm:$0xff]
    %v567 = vld [vmem:[%s3 + $0x98] sm:$0xff]
    %v568 = vld [vmem:[%s3 + $0xa0] sm:$0xff]
    %v569 = vld [vmem:[%s3 + $0xa8] sm:$0xff]
    %v570 = vld [vmem:[%s3 + $0xb0] sm:$0xff]
    %v571 = vld [vmem:[%s3 + $0xb8] sm:$0xff]
    %v572 = vld [vmem:[%s3 + $0xc0] sm:$0xff]
    %v573 = vld [vmem:[%s3 + $0xc8] sm:$0xff]
    %v574 = vld [vmem:[%s3 + $0xd0] sm:$0xff]
    %v575 = vld [vmem:[%s3 + $0xd8] sm:$0xff]
    %v576 = vld [vmem:[%s3 + $0xe0] sm:$0xff]
    %v577 = vld [vmem:[%s3 + $0xe8] sm:$0xff]
    %v578 = vld [vmem:[%s3 + $0xf0] sm:$0xff]
    %v579 = vld [vmem:[%s3 + $0xf8] sm:$0xff]
    %v580 = vld [vmem:[%s3 + $0x100] sm:$0xff]
    %v581 = vld [vmem:[%s3 + $0x108] sm:$0xff]
    %v582 = vld [vmem:[%s3 + $0x110] sm:$0xff]
    %v583 = vld [vmem:[%s3 + $0x118] sm:$0xff]
    %v584 = vld [vmem:[%s3 + $0x120] sm:$0xff]
    %v585 = vld [vmem:[%s3 + $0x128] sm:$0xff]
    %v586 = vld [vmem:[%s3 + $0x130] sm:$0xff]
    %v587 = vld [vmem:[%s3 + $0x138] sm:$0xff]
    %v588 = vld [vmem:[%s3 + $0x140] sm:$0xff]
    %v589 = vld [vmem:[%s3 + $0x148] sm:$0xff]
    %v590 = vld [vmem:[%s3 + $0x150] sm:$0xff]
    %v591 = vld [vmem:[%s3 + $0x158] sm:$0xff]
    %v592 = vld [vmem:[%s3 + $0x160] sm:$0xff]
    %v593 = vld [vmem:[%s3 + $0x168] sm:$0xff]
    %v594 = vld [vmem:[%s3 + $0x170] sm:$0xff]
    %v595 = vld [vmem:[%s3 + $0x178] sm:$0xff]
    %v596 = vld [vmem:[%s3 + $0x180] sm:$0xff]
    %v597 = vld [vmem:[%s3 + $0x188] sm:$0xff]
    %v598 = vld [vmem:[%s3 + $0x190] sm:$0xff]
    %v599 = vld [vmem:[%s3 + $0x198] sm:$0xff]
    %v600 = vld [vmem:[%s3 + $0x1a0] sm:$0xff]
    %v601 = vld [vmem:[%s3 + $0x1a8] sm:$0xff]
    %v602 = vld [vmem:[%s3 + $0x1b0] sm:$0xff]
    %v603 = vld [vmem:[%s3 + $0x1b8] sm:$0xff]
    %v604 = vld [vmem:[%s3 + $0x1c0] sm:$0xff]
    %v605 = vld [vmem:[%s3 + $0x1c8] sm:$0xff]
    %v606 = vld [vmem:[%s3 + $0x1d0] sm:$0xff]
    %v607 = vld [vmem:[%s3 + $0x1d8] sm:$0xff]
    %v608 = vld [vmem:[%s3 + $0x1e0] sm:$0xff]
    %v609 = vld [vmem:[%s3 + $0x1e8] sm:$0xff]
    %v610 = vld [vmem:[%s3 + $0x1f0] sm:$0xff]
    %v611 = vld [vmem:[%s3 + $0x1f8] sm:$0xff]
    %v612 = vld [vmem:[%s3 + $0x200] sm:$0xff]
    %v613 = vld [vmem:[%s3 + $0x208] sm:$0xff]
    %v614 = vld [vmem:[%s3 + $0x210] sm:$0xff]
    %v615 = vld [vmem:[%s3 + $0x218] sm:$0xff]
    %v616 = vld [vmem:[%s3 + $0x220] sm:$0xff]
    %v617 = vld [vmem:[%s3 + $0x228] sm:$0xff]
    %v618 = vld [vmem:[%s3 + $0x230] sm:$0xff]
    %v619 = vld [vmem:[%s3 + $0x238] sm:$0xff]
    %v620 = vld [vmem:[%s3 + $0x240] sm:$0xff]
    %v621 = vld [vmem:[%s3 + $0x248] sm:$0xff]
    %v622 = vld [vmem:[%s3 + $0x250] sm:$0xff]
    %v623 = vld [vmem:[%s3 + $0x258] sm:$0xff]
    %v624 = vld [vmem:[%s3 + $0x260] sm:$0xff]
    %v625 = vld [vmem:[%s3 + $0x268] sm:$0xff]
    %v626 = vld [vmem:[%s3 + $0x270] sm:$0xff]
    %v627 = vld [vmem:[%s3 + $0x278] sm:$0xff]
    %v628 = vld [vmem:[%s3 + $0x280] sm:$0xff]
    %v629 = vld [vmem:[%s3 + $0x288] sm:$0xff]
    %v630 = vld [vmem:[%s3 + $0x290] sm:$0xff]
    %v631 = vld [vmem:[%s3 + $0x298] sm:$0xff]
    %v632 = vld [vmem:[%s3 + $0x2a0] sm:$0xff]
    %v633 = vld [vmem:[%s3 + $0x2a8] sm:$0xff]
    %v634 = vld [vmem:[%s3 + $0x2b0] sm:$0xff]
    %v635 = vld [vmem:[%s3 + $0x2b8] sm:$0xff]
    %v636 = vld [vmem:[%s3 + $0x2c0] sm:$0xff]
    %v637 = vld [vmem:[%s3 + $0x2c8] sm:$0xff]
    %v638 = vld [vmem:[%s3 + $0x2d0] sm:$0xff]
    %v639 = vld [vmem:[%s3 + $0x2d8] sm:$0xff]
    %v640 = vld [vmem:[%s3 + $0x2e0] sm:$0xff]
    %v641 = vld [vmem:[%s3 + $0x2e8] sm:$0xff]
    %v642 = vld [vmem:[%s3 + $0x2f0] sm:$0xff]
    %v643 = vld [vmem:[%s3 + $0x2f8] sm:$0xff]
    %v644 = vld [vmem:[%s3 + $0x300] sm:$0xff]
    %v645 = vld [vmem:[%s3 + $0x308] sm:$0xff]
    %v646 = vld [vmem:[%s3 + $0x310] sm:$0xff]
    %v647 = vld [vmem:[%s3 + $0x318] sm:$0xff]
    %v648 = vld [vmem:[%s3 + $0x320] sm:$0xff]
    %v649 = vld [vmem:[%s3 + $0x328] sm:$0xff]
    %v650 = vld [vmem:[%s3 + $0x330] sm:$0xff]
    %v651 = vld [vmem:[%s3 + $0x338] sm:$0xff]
    %v652 = vld [vmem:[%s3 + $0x340] sm:$0xff]
    %v653 = vld [vmem:[%s3 + $0x348] sm:$0xff]
    %v654 = vld [vmem:[%s3 + $0x350] sm:$0xff]
    %v655 = vld [vmem:[%s3 + $0x358] sm:$0xff]
    %v656 = vld [vmem:[%s3 + $0x360] sm:$0xff]
    %v657 = vld [vmem:[%s3 + $0x368] sm:$0xff]
    %v658 = vld [vmem:[%s3 + $0x370] sm:$0xff]
    %v659 = vld [vmem:[%s3 + $0x378] sm:$0xff]
    %v660 = vld [vmem:[%s3 + $0x380] sm:$0xff]
    %v661 = vld [vmem:[%s3 + $0x388] sm:$0xff]
    %v662 = vld [vmem:[%s3 + $0x390] sm:$0xff]
    %v663 = vld [vmem:[%s3 + $0x398] sm:$0xff]
    %v664 = vld [vmem:[%s3 + $0x3a0] sm:$0xff]
    %v665 = vld [vmem:[%s3 + $0x3a8] sm:$0xff]
    %v666 = vld [vmem:[%s3 + $0x3b0] sm:$0xff]
    %v667 = vld [vmem:[%s3 + $0x3b8] sm:$0xff]
    %v668 = vld [vmem:[%s3 + $0x3c0] sm:$0xff]
    %v669 = vld [vmem:[%s3 + $0x3c8] sm:$0xff]
    %v670 = vld [vmem:[%s3 + $0x3d0] sm:$0xff]
    %v671 = vld [vmem:[%s3 + $0x3d8] sm:$0xff]
    %v672 = vld [vmem:[%s3 + $0x3e0] sm:$0xff]
    %v673 = vld [vmem:[%s3 + $0x3e8] sm:$0xff]
    %v674 = vld [vmem:[%s3 + $0x3f0] sm:$0xff]
    %v675 = vld [vmem:[%s3 + $0x3f8] sm:$0xff]
    %v676 = vld [vmem:[%s3 + $0x400] sm:$0xff]
    %v677 = vld [vmem:[%s3 + $0x408] sm:$0xff]
    %v678 = vld [vmem:[%s3 + $0x410] sm:$0xff]
    %v679 = vld [vmem:[%s3 + $0x418] sm:$0xff]
    %v680 = vld [vmem:[%s3 + $0x420] sm:$0xff]
    %v681 = vld [vmem:[%s3 + $0x428] sm:$0xff]
    %v682 = vld [vmem:[%s3 + $0x430] sm:$0xff]
    %v683 = vld [vmem:[%s4] sm:$0x7]
    %v685 = vlaneseq
    %v686 = vshrl.u32 %v685, 7
    %v687 = vsub.s32 0, %v686
    %v688 = vrot.slane %v683, %v687
    %v689 = vlaneseq
    %v690 = vshrl.u32 %v689, 7
    %v691 = vsub.s32 1, %v690
    %v692 = vrot.slane %v683, %v691
    %v693 = vlaneseq
    %v694 = vshrl.u32 %v693, 7
    %v695 = vsub.s32 2, %v694
    %v696 = vrot.slane %v683, %v695
    %vm700 = vcmask 850944
    %v702 = vsel %vm700, %v502, 0
    %v705 = vsel %vm700, %v505, 0
    %v708 = vsel %vm700, %v508, 0
    %v711 = vsel %vm700, %v511, 0
    %v714 = vsel %vm700, %v514, 0
    %v717 = vsel %vm700, %v517, 0
    %v720 = vsel %vm700, %v520, 0
    %v723 = vsel %vm700, %v523, 0
    %v726 = vsel %vm700, %v526, 0
    %v729 = vsel %vm700, %v529, 0
    %v732 = vsel %vm700, %v532, 0
    %v735 = vsel %vm700, %v535, 0
    %v738 = vsel %vm700, %v538, 0
    %v741 = vsel %vm700, %v541, 0
    %v744 = vsel %vm700, %v544, 0
    %v747 = vsel %vm700, %v547, 0
    %749 = vmatprep.subr.mxu0 %v594
    %750 = vmatpush1.msra.mxu0 %v593
    %751 = vmatprep.subr.mxu0 %v591
    %752 = vmatpush1.msra.mxu0 %v590
    %753 = vmatprep.subr.mxu0 %v588
    %754 = vmatpush1.msra.mxu0 %v587
    %755 = vmatprep.subr.mxu0 %v585
    %756 = vmatpush1.msra.mxu0 %v584
    %757 = vmatprep.subr.mxu0 %v582
    %758 = vmatpush1.msra.mxu0 %v581
    %759 = vmatprep.subr.mxu0 %v579
    %760 = vmatpush1.msra.mxu0 %v578
    %761 = vmatprep.subr.mxu0 %v576
    %762 = vmatpush1.msra.mxu0 %v575
    %763 = vmatprep.subr.mxu0 %v573
    %764 = vmatpush1.msra.mxu0 %v572
    %765 = vmatprep.subr.mxu0 %v570
    %766 = vmatpush1.msra.mxu0 %v569
    %767 = vmatprep.subr.mxu0 %v567
    %768 = vmatpush1.msra.mxu0 %v566
    %769 = vmatprep.subr.mxu0 %v564
    %770 = vmatpush1.msra.mxu0 %v563
    %771 = vmatprep.subr.mxu0 %v561
    %772 = vmatpush1.msra.mxu0 %v560
    %773 = vmatprep.subr.mxu0 %v558
    %774 = vmatpush1.msra.mxu0 %v557
    %775 = vmatprep.subr.mxu0 %v555
    %776 = vmatpush1.msra.mxu0 %v554
    %777 = vmatprep.subr.mxu0 %v552
    %778 = vmatpush1.msra.mxu0 %v551
    %779 = vmatprep.subr.mxu0 %v549
    %780 = vmatpush1.msra.mxu0 %v548
    %781 = vmatprep.subr.mxu0 %v642
    %782 = vmatpush2.msra.mxu0 %v641
    %783 = vmatprep.subr.mxu0 %v639
    %784 = vmatpush2.msra.mxu0 %v638
    %785 = vmatprep.subr.mxu0 %v636
    %786 = vmatpush2.msra.mxu0 %v635
    %787 = vmatprep.subr.mxu0 %v633
    %788 = vmatpush2.msra.mxu0 %v632
    %789 = vmatprep.subr.mxu0 %v630
    %790 = vmatpush2.msra.mxu0 %v629
    %791 = vmatprep.subr.mxu0 %v627
    %792 = vmatpush2.msra.mxu0 %v626
    %793 = vmatprep.subr.mxu0 %v624
    %794 = vmatpush2.msra.mxu0 %v623
    %795 = vmatprep.subr.mxu0 %v621
    %796 = vmatpush2.msra.mxu0 %v620
    %797 = vmatprep.subr.mxu0 %v618
    %798 = vmatpush2.msra.mxu0 %v617
    %799 = vmatprep.subr.mxu0 %v615
    %800 = vmatpush2.msra.mxu0 %v614
    %801 = vmatprep.subr.mxu0 %v612
    %802 = vmatpush2.msra.mxu0 %v611
    %803 = vmatprep.subr.mxu0 %v609
    %804 = vmatpush2.msra.mxu0 %v608
    %805 = vmatprep.subr.mxu0 %v606
    %806 = vmatpush2.msra.mxu0 %v605
    %807 = vmatprep.subr.mxu0 %v603
    %808 = vmatpush2.msra.mxu0 %v602
    %809 = vmatprep.subr.mxu0 %v600
    %810 = vmatpush2.msra.mxu0 %v599
    %811 = vmatprep.subr.mxu0 %v597
    %812 = vmatpush2.msra.mxu0 %v596
    %813 = vmatprep.mubr.f32.mxu0 %v501
    %814 = vmatmul.mubr.f32.gmra.mxu0 %v500
    %v815 = vpop.f32.mrf.mxu0
    %v816 = vadd.f32 %v688, %v815
    %v817 = vpop.f32.mrf.mxu0
    %v818 = vadd.f32 %v692, %v817
    %819 = vmatprep.mubr.f32.mxu0 %v504
    %820 = vmatmul.mubr.f32.gmra.mxu0 %v503
    %v821 = vpop.f32.mrf.mxu0
    %v822 = vadd.f32 %v688, %v821
    %v823 = vpop.f32.mrf.mxu0
    %v824 = vadd.f32 %v692, %v823
    %825 = vmatprep.mubr.f32.mxu0 %v507
    %826 = vmatmul.mubr.f32.gmra.mxu0 %v506
    %v827 = vpop.f32.mrf.mxu0
    %v828 = vadd.f32 %v688, %v827
    %v829 = vpop.f32.mrf.mxu0
    %v830 = vadd.f32 %v692, %v829
    %831 = vmatprep.mubr.f32.mxu0 %v510
    %832 = vmatmul.mubr.f32.gmra.mxu0 %v509
    %v833 = vpop.f32.mrf.mxu0
    %v834 = vadd.f32 %v688, %v833
    %v835 = vpop.f32.mrf.mxu0
    %v836 = vadd.f32 %v692, %v835
    %837 = vmatprep.mubr.f32.mxu0 %v513
    %838 = vmatmul.mubr.f32.gmra.mxu0 %v512
    %v839 = vpop.f32.mrf.mxu0
    %v840 = vadd.f32 %v688, %v839
    %v841 = vpop.f32.mrf.mxu0
    %v842 = vadd.f32 %v692, %v841
    %843 = vmatprep.mubr.f32.mxu0 %v516
    %844 = vmatmul.mubr.f32.gmra.mxu0 %v515
    %v845 = vpop.f32.mrf.mxu0
    %v846 = vadd.f32 %v688, %v845
    %v847 = vpop.f32.mrf.mxu0
    %v848 = vadd.f32 %v692, %v847
    %849 = vmatprep.mubr.f32.mxu0 %v519
    %850 = vmatmul.mubr.f32.gmra.mxu0 %v518
    %v851 = vpop.f32.mrf.mxu0
    %v852 = vadd.f32 %v688, %v851
    %v853 = vpop.f32.mrf.mxu0
    %v854 = vadd.f32 %v692, %v853
    %855 = vmatprep.mubr.f32.mxu0 %v522
    %856 = vmatmul.mubr.f32.gmra.mxu0 %v521
    %v857 = vpop.f32.mrf.mxu0
    %v858 = vadd.f32 %v688, %v857
    %v859 = vpop.f32.mrf.mxu0
    %v860 = vadd.f32 %v692, %v859
    %861 = vmatprep.mubr.f32.mxu0 %v525
    %862 = vmatmul.mubr.f32.gmra.mxu0 %v524
    %v863 = vpop.f32.mrf.mxu0
    %v864 = vadd.f32 %v688, %v863
    %v865 = vpop.f32.mrf.mxu0
    %v866 = vadd.f32 %v692, %v865
    %867 = vmatprep.mubr.f32.mxu0 %v528
    %868 = vmatmul.mubr.f32.gmra.mxu0 %v527
    %v869 = vpop.f32.mrf.mxu0
    %v870 = vadd.f32 %v688, %v869
    %v871 = vpop.f32.mrf.mxu0
    %v872 = vadd.f32 %v692, %v871
    %873 = vmatprep.mubr.f32.mxu0 %v531
    %874 = vmatmul.mubr.f32.gmra.mxu0 %v530
    %v875 = vpop.f32.mrf.mxu0
    %v876 = vadd.f32 %v688, %v875
    %v877 = vpop.f32.mrf.mxu0
    %v878 = vadd.f32 %v692, %v877
    %879 = vmatprep.mubr.f32.mxu0 %v534
    %880 = vmatmul.mubr.f32.gmra.mxu0 %v533
    %v881 = vpop.f32.mrf.mxu0
    %v882 = vadd.f32 %v688, %v881
    %v883 = vpop.f32.mrf.mxu0
    %v884 = vadd.f32 %v692, %v883
    %885 = vmatprep.mubr.f32.mxu0 %v537
    %886 = vmatmul.mubr.f32.gmra.mxu0 %v536
    %v887 = vpop.f32.mrf.mxu0
    %v888 = vadd.f32 %v688, %v887
    %v889 = vpop.f32.mrf.mxu0
    %v890 = vadd.f32 %v692, %v889
    %891 = vmatprep.mubr.f32.mxu0 %v540
    %892 = vmatmul.mubr.f32.gmra.mxu0 %v539
    %v893 = vpop.f32.mrf.mxu0
    %v894 = vadd.f32 %v688, %v893
    %v895 = vpop.f32.mrf.mxu0
    %v896 = vadd.f32 %v692, %v895
    %897 = vmatprep.mubr.f32.mxu0 %v543
    %898 = vmatmul.mubr.f32.gmra.mxu0 %v542
    %v899 = vpop.f32.mrf.mxu0
    %v900 = vadd.f32 %v688, %v899
    %v901 = vpop.f32.mrf.mxu0
    %v902 = vadd.f32 %v692, %v901
    %903 = vmatprep.mubr.f32.mxu0 %v546
    %904 = vmatmul.mubr.f32.gmra.mxu0 %v545
    %v905 = vpop.f32.mrf.mxu0
    %v906 = vadd.f32 %v688, %v905
    %v907 = vpop.f32.mrf.mxu0
    %v908 = vadd.f32 %v692, %v907
    %909 = vdwg.mxu0
    %910 = vmatprep.subr.mxu0 0.0
    %911 = vmatpush1.msra.mxu0 0.0
    %912 = vmatprep.subr.mxu0 0.0
    %913 = vmatpush1.msra.mxu0 0.0
    %914 = vmatprep.subr.mxu0 0.0
    %915 = vmatpush1.msra.mxu0 0.0
    %916 = vmatprep.subr.mxu0 %v681
    %917 = vmatpush1.msra.mxu0 %v680
    %918 = vmatprep.subr.mxu0 %v678
    %919 = vmatpush1.msra.mxu0 %v677
    %920 = vmatprep.subr.mxu0 %v675
    %921 = vmatpush1.msra.mxu0 %v674
    %922 = vmatprep.subr.mxu0 %v672
    %923 = vmatpush1.msra.mxu0 %v671
    %924 = vmatprep.subr.mxu0 %v669
    %925 = vmatpush1.msra.mxu0 %v668
    %926 = vmatprep.subr.mxu0 %v666
    %927 = vmatpush1.msra.mxu0 %v665
    %928 = vmatprep.subr.mxu0 %v663
    %929 = vmatpush1.msra.mxu0 %v662
    %930 = vmatprep.subr.mxu0 %v660
    %931 = vmatpush1.msra.mxu0 %v659
    %932 = vmatprep.subr.mxu0 %v657
    %933 = vmatpush1.msra.mxu0 %v656
    %934 = vmatprep.subr.mxu0 %v654
    %935 = vmatpush1.msra.mxu0 %v653
    %936 = vmatprep.subr.mxu0 %v651
    %937 = vmatpush1.msra.mxu0 %v650
    %938 = vmatprep.subr.mxu0 %v648
    %939 = vmatpush1.msra.mxu0 %v647
    %940 = vmatprep.subr.mxu0 %v645
    %941 = vmatpush1.msra.mxu0 %v644
    %942 = vmatprep.subr.mxu0 0.0
    %943 = vmatpush2.msra.mxu0 0.0
    %944 = vmatprep.subr.mxu0 0.0
    %945 = vmatpush2.msra.mxu0 0.0
    %946 = vmatprep.subr.mxu0 0.0
    %947 = vmatpush2.msra.mxu0 0.0
    %948 = vmatprep.subr.mxu0 0.0
    %949 = vmatpush2.msra.mxu0 0.0
    %950 = vmatprep.subr.mxu0 0.0
    %951 = vmatpush2.msra.mxu0 0.0
    %952 = vmatprep.subr.mxu0 0.0
    %953 = vmatpush2.msra.mxu0 0.0
    %954 = vmatprep.subr.mxu0 0.0
    %955 = vmatpush2.msra.mxu0 0.0
    %956 = vmatprep.subr.mxu0 0.0
    %957 = vmatpush2.msra.mxu0 0.0
    %958 = vmatprep.subr.mxu0 0.0
    %959 = vmatpush2.msra.mxu0 0.0
    %960 = vmatprep.subr.mxu0 0.0
    %961 = vmatpush2.msra.mxu0 0.0
    %962 = vmatprep.subr.mxu0 0.0
    %963 = vmatpush2.msra.mxu0 0.0
    %964 = vmatprep.subr.mxu0 0.0
    %965 = vmatpush2.msra.mxu0 0.0
    %966 = vmatprep.subr.mxu0 0.0
    %967 = vmatpush2.msra.mxu0 0.0
    %968 = vmatprep.subr.mxu0 0.0
    %969 = vmatpush2.msra.mxu0 0.0
    %970 = vmatprep.subr.mxu0 0.0
    %971 = vmatpush2.msra.mxu0 0.0
    %972 = vmatprep.subr.mxu0 0.0
    %973 = vmatpush2.msra.mxu0 0.0
    %974 = vmatprep.mubr.f32.mxu0 0.0
    %975 = vmatmul.mubr.f32.gmra.mxu0 %v702
    %v976 = vpop.f32.mrf.mxu0
    %v977 = vadd.f32 %v816, %v976
    %v978 = vpop.f32.mrf.mxu0
    %v979 = vadd.f32 %v818, %v978
    %980 = vmatprep.mubr.f32.mxu0 0.0
    %981 = vmatmul.mubr.f32.gmra.mxu0 %v705
    %v982 = vpop.f32.mrf.mxu0
    %v983 = vadd.f32 %v822, %v982
    %v984 = vpop.f32.mrf.mxu0
    %v985 = vadd.f32 %v824, %v984
    %986 = vmatprep.mubr.f32.mxu0 0.0
    %987 = vmatmul.mubr.f32.gmra.mxu0 %v708
    %v988 = vpop.f32.mrf.mxu0
    %v989 = vadd.f32 %v828, %v988
    %v990 = vpop.f32.mrf.mxu0
    %v991 = vadd.f32 %v830, %v990
    %992 = vmatprep.mubr.f32.mxu0 0.0
    %993 = vmatmul.mubr.f32.gmra.mxu0 %v711
    %v994 = vpop.f32.mrf.mxu0
    %v995 = vadd.f32 %v834, %v994
    %v996 = vpop.f32.mrf.mxu0
    %v997 = vadd.f32 %v836, %v996
    %998 = vmatprep.mubr.f32.mxu0 0.0
    %999 = vmatmul.mubr.f32.gmra.mxu0 %v714
    %v1000 = vpop.f32.mrf.mxu0
    %v1001 = vadd.f32 %v840, %v1000
    %v1002 = vpop.f32.mrf.mxu0
    %v1003 = vadd.f32 %v842, %v1002
    %1004 = vmatprep.mubr.f32.mxu0 0.0
    %1005 = vmatmul.mubr.f32.gmra.mxu0 %v717
    %v1006 = vpop.f32.mrf.mxu0
    %v1007 = vadd.f32 %v846, %v1006
    %v1008 = vpop.f32.mrf.mxu0
    %v1009 = vadd.f32 %v848, %v1008
    %1010 = vmatprep.mubr.f32.mxu0 0.0
    %1011 = vmatmul.mubr.f32.gmra.mxu0 %v720
    %v1012 = vpop.f32.mrf.mxu0
    %v1013 = vadd.f32 %v852, %v1012
    %v1014 = vpop.f32.mrf.mxu0
    %v1015 = vadd.f32 %v854, %v1014
    %1016 = vmatprep.mubr.f32.mxu0 0.0
    %1017 = vmatmul.mubr.f32.gmra.mxu0 %v723
    %v1018 = vpop.f32.mrf.mxu0
    %v1019 = vadd.f32 %v858, %v1018
    %v1020 = vpop.f32.mrf.mxu0
    %v1021 = vadd.f32 %v860, %v1020
    %1022 = vmatprep.mubr.f32.mxu0 0.0
    %1023 = vmatmul.mubr.f32.gmra.mxu0 %v726
    %v1024 = vpop.f32.mrf.mxu0
    %v1025 = vadd.f32 %v864, %v1024
    %v1026 = vpop.f32.mrf.mxu0
    %v1027 = vadd.f32 %v866, %v1026
    %1028 = vmatprep.mubr.f32.mxu0 0.0
    %1029 = vmatmul.mubr.f32.gmra.mxu0 %v729
    %v1030 = vpop.f32.mrf.mxu0
    %v1031 = vadd.f32 %v870, %v1030
    %v1032 = vpop.f32.mrf.mxu0
    %v1033 = vadd.f32 %v872, %v1032
    %1034 = vmatprep.mubr.f32.mxu0 0.0
    %1035 = vmatmul.mubr.f32.gmra.mxu0 %v732
    %v1036 = vpop.f32.mrf.mxu0
    %v1037 = vadd.f32 %v876, %v1036
    %v1038 = vpop.f32.mrf.mxu0
    %v1039 = vadd.f32 %v878, %v1038
    %1040 = vmatprep.mubr.f32.mxu0 0.0
    %1041 = vmatmul.mubr.f32.gmra.mxu0 %v735
    %v1042 = vpop.f32.mrf.mxu0
    %v1043 = vadd.f32 %v882, %v1042
    %v1044 = vpop.f32.mrf.mxu0
    %v1045 = vadd.f32 %v884, %v1044
    %1046 = vmatprep.mubr.f32.mxu0 0.0
    %1047 = vmatmul.mubr.f32.gmra.mxu0 %v738
    %v1048 = vpop.f32.mrf.mxu0
    %v1049 = vadd.f32 %v888, %v1048
    %v1050 = vpop.f32.mrf.mxu0
    %v1051 = vadd.f32 %v890, %v1050
    %1052 = vmatprep.mubr.f32.mxu0 0.0
    %1053 = vmatmul.mubr.f32.gmra.mxu0 %v741
    %v1054 = vpop.f32.mrf.mxu0
    %v1055 = vadd.f32 %v894, %v1054
    %v1056 = vpop.f32.mrf.mxu0
    %v1057 = vadd.f32 %v896, %v1056
    %1058 = vmatprep.mubr.f32.mxu0 0.0
    %1059 = vmatmul.mubr.f32.gmra.mxu0 %v744
    %v1060 = vpop.f32.mrf.mxu0
    %v1061 = vadd.f32 %v900, %v1060
    %v1062 = vpop.f32.mrf.mxu0
    %v1063 = vadd.f32 %v902, %v1062
    %1064 = vmatprep.mubr.f32.mxu0 0.0
    %1065 = vmatmul.mubr.f32.gmra.mxu0 %v747
    %v1066 = vpop.f32.mrf.mxu0
    %v1067 = vadd.f32 %v906, %v1066
    %v1068 = vpop.f32.mrf.mxu0
    %v1069 = vadd.f32 %v908, %v1068
    %1070 = vdwg.mxu0
    %1071 = vmatprep.subr.mxu0 0.0
    %1072 = vmatpush1.msra.mxu0 %v595
    %1073 = vmatprep.subr.mxu0 0.0
    %1074 = vmatpush1.msra.mxu0 %v592
    %1075 = vmatprep.subr.mxu0 0.0
    %1076 = vmatpush1.msra.mxu0 %v589
    %1077 = vmatprep.subr.mxu0 0.0
    %1078 = vmatpush1.msra.mxu0 %v586
    %1079 = vmatprep.subr.mxu0 0.0
    %1080 = vmatpush1.msra.mxu0 %v583
    %1081 = vmatprep.subr.mxu0 0.0
    %1082 = vmatpush1.msra.mxu0 %v580
    %1083 = vmatprep.subr.mxu0 0.0
    %1084 = vmatpush1.msra.mxu0 %v577
    %1085 = vmatprep.subr.mxu0 0.0
    %1086 = vmatpush1.msra.mxu0 %v574
    %1087 = vmatprep.subr.mxu0 0.0
    %1088 = vmatpush1.msra.mxu0 %v571
    %1089 = vmatprep.subr.mxu0 0.0
    %1090 = vmatpush1.msra.mxu0 %v568
    %1091 = vmatprep.subr.mxu0 0.0
    %1092 = vmatpush1.msra.mxu0 %v565
    %1093 = vmatprep.subr.mxu0 0.0
    %1094 = vmatpush1.msra.mxu0 %v562
    %1095 = vmatprep.subr.mxu0 0.0
    %1096 = vmatpush1.msra.mxu0 %v559
    %1097 = vmatprep.subr.mxu0 0.0
    %1098 = vmatpush1.msra.mxu0 %v556
    %1099 = vmatprep.subr.mxu0 0.0
    %1100 = vmatpush1.msra.mxu0 %v553
    %1101 = vmatprep.subr.mxu0 0.0
    %1102 = vmatpush1.msra.mxu0 %v550
    %1103 = vmatprep.subr.mxu0 0.0
    %1104 = vmatpush2.msra.mxu0 %v643
    %1105 = vmatprep.subr.mxu0 0.0
    %1106 = vmatpush2.msra.mxu0 %v640
    %1107 = vmatprep.subr.mxu0 0.0
    %1108 = vmatpush2.msra.mxu0 %v637
    %1109 = vmatprep.subr.mxu0 0.0
    %1110 = vmatpush2.msra.mxu0 %v634
    %1111 = vmatprep.subr.mxu0 0.0
    %1112 = vmatpush2.msra.mxu0 %v631
    %1113 = vmatprep.subr.mxu0 0.0
    %1114 = vmatpush2.msra.mxu0 %v628
    %1115 = vmatprep.subr.mxu0 0.0
    %1116 = vmatpush2.msra.mxu0 %v625
    %1117 = vmatprep.subr.mxu0 0.0
    %1118 = vmatpush2.msra.mxu0 %v622
    %1119 = vmatprep.subr.mxu0 0.0
    %1120 = vmatpush2.msra.mxu0 %v619
    %1121 = vmatprep.subr.mxu0 0.0
    %1122 = vmatpush2.msra.mxu0 %v616
    %1123 = vmatprep.subr.mxu0 0.0
    %1124 = vmatpush2.msra.mxu0 %v613
    %1125 = vmatprep.subr.mxu0 0.0
    %1126 = vmatpush2.msra.mxu0 %v610
    %1127 = vmatprep.subr.mxu0 0.0
    %1128 = vmatpush2.msra.mxu0 %v607
    %1129 = vmatprep.subr.mxu0 0.0
    %1130 = vmatpush2.msra.mxu0 %v604
    %1131 = vmatprep.subr.mxu0 0.0
    %1132 = vmatpush2.msra.mxu0 %v601
    %1133 = vmatprep.subr.mxu0 0.0
    %1134 = vmatpush2.msra.mxu0 %v598
    %1135 = vmatprep.mubr.f32.mxu0 %v501
    %1136 = vmatmul.mubr.f32.gmra.mxu0 %v500
    %v1137 = vpop.f32.mrf.mxu0
    %v1138 = vadd.f32 %v696, %v1137
    %v1139 = vpop.f32.mrf.mxu0
    %1140 = vmatprep.mubr.f32.mxu0 %v504
    %1141 = vmatmul.mubr.f32.gmra.mxu0 %v503
    %v1142 = vpop.f32.mrf.mxu0
    %v1143 = vadd.f32 %v696, %v1142
    %v1144 = vpop.f32.mrf.mxu0
    %1145 = vmatprep.mubr.f32.mxu0 %v507
    %1146 = vmatmul.mubr.f32.gmra.mxu0 %v506
    %v1147 = vpop.f32.mrf.mxu0
    %v1148 = vadd.f32 %v696, %v1147
    %v1149 = vpop.f32.mrf.mxu0
    %1150 = vmatprep.mubr.f32.mxu0 %v510
    %1151 = vmatmul.mubr.f32.gmra.mxu0 %v509
    %v1152 = vpop.f32.mrf.mxu0
    %v1153 = vadd.f32 %v696, %v1152
    %v1154 = vpop.f32.mrf.mxu0
    %1155 = vmatprep.mubr.f32.mxu0 %v513
    %1156 = vmatmul.mubr.f32.gmra.mxu0 %v512
    %v1157 = vpop.f32.mrf.mxu0
    %v1158 = vadd.f32 %v696, %v1157
    %v1159 = vpop.f32.mrf.mxu0
    %1160 = vmatprep.mubr.f32.mxu0 %v516
    %1161 = vmatmul.mubr.f32.gmra.mxu0 %v515
    %v1162 = vpop.f32.mrf.mxu0
    %v1163 = vadd.f32 %v696, %v1162
    %v1164 = vpop.f32.mrf.mxu0
    %1165 = vmatprep.mubr.f32.mxu0 %v519
    %1166 = vmatmul.mubr.f32.gmra.mxu0 %v518
    %v1167 = vpop.f32.mrf.mxu0
    %v1168 = vadd.f32 %v696, %v1167
    %v1169 = vpop.f32.mrf.mxu0
    %1170 = vmatprep.mubr.f32.mxu0 %v522
    %1171 = vmatmul.mubr.f32.gmra.mxu0 %v521
    %v1172 = vpop.f32.mrf.mxu0
    %v1173 = vadd.f32 %v696, %v1172
    %v1174 = vpop.f32.mrf.mxu0
    %1175 = vmatprep.mubr.f32.mxu0 %v525
    %1176 = vmatmul.mubr.f32.gmra.mxu0 %v524
    %v1177 = vpop.f32.mrf.mxu0
    %v1178 = vadd.f32 %v696, %v1177
    %v1179 = vpop.f32.mrf.mxu0
    %1180 = vmatprep.mubr.f32.mxu0 %v528
    %1181 = vmatmul.mubr.f32.gmra.mxu0 %v527
    %v1182 = vpop.f32.mrf.mxu0
    %v1183 = vadd.f32 %v696, %v1182
    %v1184 = vpop.f32.mrf.mxu0
    %1185 = vmatprep.mubr.f32.mxu0 %v531
    %1186 = vmatmul.mubr.f32.gmra.mxu0 %v530
    %v1187 = vpop.f32.mrf.mxu0
    %v1188 = vadd.f32 %v696, %v1187
    %v1189 = vpop.f32.mrf.mxu0
    %1190 = vmatprep.mubr.f32.mxu0 %v534
    %1191 = vmatmul.mubr.f32.gmra.mxu0 %v533
    %v1192 = vpop.f32.mrf.mxu0
    %v1193 = vadd.f32 %v696, %v1192
    %v1194 = vpop.f32.mrf.mxu0
    %1195 = vmatprep.mubr.f32.mxu0 %v537
    %1196 = vmatmul.mubr.f32.gmra.mxu0 %v536
    %v1197 = vpop.f32.mrf.mxu0
    %v1198 = vadd.f32 %v696, %v1197
    %v1199 = vpop.f32.mrf.mxu0
    %1200 = vmatprep.mubr.f32.mxu0 %v540
    %1201 = vmatmul.mubr.f32.gmra.mxu0 %v539
    %v1202 = vpop.f32.mrf.mxu0
    %v1203 = vadd.f32 %v696, %v1202
    %v1204 = vpop.f32.mrf.mxu0
    %1205 = vmatprep.mubr.f32.mxu0 %v543
    %1206 = vmatmul.mubr.f32.gmra.mxu0 %v542
    %v1207 = vpop.f32.mrf.mxu0
    %v1208 = vadd.f32 %v696, %v1207
    %v1209 = vpop.f32.mrf.mxu0
    %1210 = vmatprep.mubr.f32.mxu0 %v546
    %1211 = vmatmul.mubr.f32.gmra.mxu0 %v545
    %v1212 = vpop.f32.mrf.mxu0
    %v1213 = vadd.f32 %v696, %v1212
    %v1214 = vpop.f32.mrf.mxu0
    %1215 = vdwg.mxu0
    %1216 = vmatprep.subr.mxu0 0.0
    %1217 = vmatpush1.msra.mxu0 0.0
    %1218 = vmatprep.subr.mxu0 0.0
    %1219 = vmatpush1.msra.mxu0 0.0
    %1220 = vmatprep.subr.mxu0 0.0
    %1221 = vmatpush1.msra.mxu0 0.0
    %1222 = vmatprep.subr.mxu0 0.0
    %1223 = vmatpush1.msra.mxu0 %v682
    %1224 = vmatprep.subr.mxu0 0.0
    %1225 = vmatpush1.msra.mxu0 %v679
    %1226 = vmatprep.subr.mxu0 0.0
    %1227 = vmatpush1.msra.mxu0 %v676
    %1228 = vmatprep.subr.mxu0 0.0
    %1229 = vmatpush1.msra.mxu0 %v673
    %1230 = vmatprep.subr.mxu0 0.0
    %1231 = vmatpush1.msra.mxu0 %v670
    %1232 = vmatprep.subr.mxu0 0.0
    %1233 = vmatpush1.msra.mxu0 %v667
    %1234 = vmatprep.subr.mxu0 0.0
    %1235 = vmatpush1.msra.mxu0 %v664
    %1236 = vmatprep.subr.mxu0 0.0
    %1237 = vmatpush1.msra.mxu0 %v661
    %1238 = vmatprep.subr.mxu0 0.0
    %1239 = vmatpush1.msra.mxu0 %v658
    %1240 = vmatprep.subr.mxu0 0.0
    %1241 = vmatpush1.msra.mxu0 %v655
    %1242 = vmatprep.subr.mxu0 0.0
    %1243 = vmatpush1.msra.mxu0 %v652
    %1244 = vmatprep.subr.mxu0 0.0
    %1245 = vmatpush1.msra.mxu0 %v649
    %1246 = vmatprep.subr.mxu0 0.0
    %1247 = vmatpush1.msra.mxu0 %v646
    %1248 = vmatprep.subr.mxu0 0.0
    %1249 = vmatpush2.msra.mxu0 0.0
    %1250 = vmatprep.subr.mxu0 0.0
    %1251 = vmatpush2.msra.mxu0 0.0
    %1252 = vmatprep.subr.mxu0 0.0
    %1253 = vmatpush2.msra.mxu0 0.0
    %1254 = vmatprep.subr.mxu0 0.0
    %1255 = vmatpush2.msra.mxu0 0.0
    %1256 = vmatprep.subr.mxu0 0.0
    %1257 = vmatpush2.msra.mxu0 0.0
    %1258 = vmatprep.subr.mxu0 0.0
    %1259 = vmatpush2.msra.mxu0 0.0
    %1260 = vmatprep.subr.mxu0 0.0
    %1261 = vmatpush2.msra.mxu0 0.0
    %1262 = vmatprep.subr.mxu0 0.0
    %1263 = vmatpush2.msra.mxu0 0.0
    %1264 = vmatprep.subr.mxu0 0.0
    %1265 = vmatpush2.msra.mxu0 0.0
    %1266 = vmatprep.subr.mxu0 0.0
    %1267 = vmatpush2.msra.mxu0 0.0
    %1268 = vmatprep.subr.mxu0 0.0
    %1269 = vmatpush2.msra.mxu0 0.0
    %1270 = vmatprep.subr.mxu0 0.0
    %1271 = vmatpush2.msra.mxu0 0.0
    %1272 = vmatprep.subr.mxu0 0.0
    %1273 = vmatpush2.msra.mxu0 0.0
    %1274 = vmatprep.subr.mxu0 0.0
    %1275 = vmatpush2.msra.mxu0 0.0
    %1276 = vmatprep.subr.mxu0 0.0
    %1277 = vmatpush2.msra.mxu0 0.0
    %1278 = vmatprep.subr.mxu0 0.0
    %1279 = vmatpush2.msra.mxu0 0.0
    %1280 = vmatprep.mubr.f32.mxu0 0.0
    %1281 = vmatmul.mubr.f32.gmra.mxu0 %v702
    %v1282 = vpop.f32.mrf.mxu0
    %v1283 = vadd.f32 %v1138, %v1282
    %v1284 = vpop.f32.mrf.mxu0
    %1285 = vmatprep.mubr.f32.mxu0 0.0
    %1286 = vmatmul.mubr.f32.gmra.mxu0 %v705
    %v1287 = vpop.f32.mrf.mxu0
    %v1288 = vadd.f32 %v1143, %v1287
    %v1289 = vpop.f32.mrf.mxu0
    %1290 = vmatprep.mubr.f32.mxu0 0.0
    %1291 = vmatmul.mubr.f32.gmra.mxu0 %v708
    %v1292 = vpop.f32.mrf.mxu0
    %v1293 = vadd.f32 %v1148, %v1292
    %v1294 = vpop.f32.mrf.mxu0
    %1295 = vmatprep.mubr.f32.mxu0 0.0
    %1296 = vmatmul.mubr.f32.gmra.mxu0 %v711
    %v1297 = vpop.f32.mrf.mxu0
    %v1298 = vadd.f32 %v1153, %v1297
    %v1299 = vpop.f32.mrf.mxu0
    %1300 = vmatprep.mubr.f32.mxu0 0.0
    %1301 = vmatmul.mubr.f32.gmra.mxu0 %v714
    %v1302 = vpop.f32.mrf.mxu0
    %v1303 = vadd.f32 %v1158, %v1302
    %v1304 = vpop.f32.mrf.mxu0
    %1305 = vmatprep.mubr.f32.mxu0 0.0
    %1306 = vmatmul.mubr.f32.gmra.mxu0 %v717
    %v1307 = vpop.f32.mrf.mxu0
    %v1308 = vadd.f32 %v1163, %v1307
    %v1309 = vpop.f32.mrf.mxu0
    %1310 = vmatprep.mubr.f32.mxu0 0.0
    %1311 = vmatmul.mubr.f32.gmra.mxu0 %v720
    %v1312 = vpop.f32.mrf.mxu0
    %v1313 = vadd.f32 %v1168, %v1312
    %v1314 = vpop.f32.mrf.mxu0
    %1315 = vmatprep.mubr.f32.mxu0 0.0
    %1316 = vmatmul.mubr.f32.gmra.mxu0 %v723
    %v1317 = vpop.f32.mrf.mxu0
    %v1318 = vadd.f32 %v1173, %v1317
    %v1319 = vpop.f32.mrf.mxu0
    %1320 = vmatprep.mubr.f32.mxu0 0.0
    %1321 = vmatmul.mubr.f32.gmra.mxu0 %v726
    %v1322 = vpop.f32.mrf.mxu0
    %v1323 = vadd.f32 %v1178, %v1322
    %v1324 = vpop.f32.mrf.mxu0
    %1325 = vmatprep.mubr.f32.mxu0 0.0
    %1326 = vmatmul.mubr.f32.gmra.mxu0 %v729
    %v1327 = vpop.f32.mrf.mxu0
    %v1328 = vadd.f32 %v1183, %v1327
    %v1329 = vpop.f32.mrf.mxu0
    %1330 = vmatprep.mubr.f32.mxu0 0.0
    %1331 = vmatmul.mubr.f32.gmra.mxu0 %v732
    %v1332 = vpop.f32.mrf.mxu0
    %v1333 = vadd.f32 %v1188, %v1332
    %v1334 = vpop.f32.mrf.mxu0
    %1335 = vmatprep.mubr.f32.mxu0 0.0
    %1336 = vmatmul.mubr.f32.gmra.mxu0 %v735
    %v1337 = vpop.f32.mrf.mxu0
    %v1338 = vadd.f32 %v1193, %v1337
    %v1339 = vpop.f32.mrf.mxu0
    %1340 = vmatprep.mubr.f32.mxu0 0.0
    %1341 = vmatmul.mubr.f32.gmra.mxu0 %v738
    %v1342 = vpop.f32.mrf.mxu0
    %v1343 = vadd.f32 %v1198, %v1342
    %v1344 = vpop.f32.mrf.mxu0
    %1345 = vmatprep.mubr.f32.mxu0 0.0
    %1346 = vmatmul.mubr.f32.gmra.mxu0 %v741
    %v1347 = vpop.f32.mrf.mxu0
    %v1348 = vadd.f32 %v1203, %v1347
    %v1349 = vpop.f32.mrf.mxu0
    %1350 = vmatprep.mubr.f32.mxu0 0.0
    %1351 = vmatmul.mubr.f32.gmra.mxu0 %v744
    %v1352 = vpop.f32.mrf.mxu0
    %v1353 = vadd.f32 %v1208, %v1352
    %v1354 = vpop.f32.mrf.mxu0
    %1355 = vmatprep.mubr.f32.mxu0 0.0
    %1356 = vmatmul.mubr.f32.gmra.mxu0 %v747
    %v1357 = vpop.f32.mrf.mxu0
    %v1358 = vadd.f32 %v1213, %v1357
    %v1359 = vpop.f32.mrf.mxu0
    %1360 = vdwg.mxu0
    %v1361 = vmax.f32 %v977, 0.0
    %v1362 = vmax.f32 %v979, 0.0
    %v1363 = vmax.f32 %v1283, 0.0
    %v1364 = vmax.f32 %v983, 0.0
    %v1365 = vmax.f32 %v985, 0.0
    %v1366 = vmax.f32 %v1288, 0.0
    %v1367 = vmax.f32 %v989, 0.0
    %v1368 = vmax.f32 %v991, 0.0
    %v1369 = vmax.f32 %v1293, 0.0
    %v1370 = vmax.f32 %v995, 0.0
    %v1371 = vmax.f32 %v997, 0.0
    %v1372 = vmax.f32 %v1298, 0.0
    %v1373 = vmax.f32 %v1001, 0.0
    %v1374 = vmax.f32 %v1003, 0.0
    %v1375 = vmax.f32 %v1303, 0.0
    %v1376 = vmax.f32 %v1007, 0.0
    %v1377 = vmax.f32 %v1009, 0.0
    %v1378 = vmax.f32 %v1308, 0.0
    %v1379 = vmax.f32 %v1013, 0.0
    %v1380 = vmax.f32 %v1015, 0.0
    %v1381 = vmax.f32 %v1313, 0.0
    %v1382 = vmax.f32 %v1019, 0.0
    %v1383 = vmax.f32 %v1021, 0.0
    %v1384 = vmax.f32 %v1318, 0.0
    %v1385 = vmax.f32 %v1025, 0.0
    %v1386 = vmax.f32 %v1027, 0.0
    %v1387 = vmax.f32 %v1323, 0.0
    %v1388 = vmax.f32 %v1031, 0.0
    %v1389 = vmax.f32 %v1033, 0.0
    %v1390 = vmax.f32 %v1328, 0.0
    %v1391 = vmax.f32 %v1037, 0.0
    %v1392 = vmax.f32 %v1039, 0.0
    %v1393 = vmax.f32 %v1333, 0.0
    %v1394 = vmax.f32 %v1043, 0.0
    %v1395 = vmax.f32 %v1045, 0.0
    %v1396 = vmax.f32 %v1338, 0.0
    %v1397 = vmax.f32 %v1049, 0.0
    %v1398 = vmax.f32 %v1051, 0.0
    %v1399 = vmax.f32 %v1343, 0.0
    %v1400 = vmax.f32 %v1055, 0.0
    %v1401 = vmax.f32 %v1057, 0.0
    %v1402 = vmax.f32 %v1348, 0.0
    %v1403 = vmax.f32 %v1061, 0.0
    %v1404 = vmax.f32 %v1063, 0.0
    %v1405 = vmax.f32 %v1353, 0.0
    %v1406 = vmax.f32 %v1067, 0.0
    %v1407 = vmax.f32 %v1069, 0.0
    %v1408 = vmax.f32 %v1358, 0.0
    %v1409 = vld [vmem:[%s5] sm:$0xff]
    %v1410 = vld [vmem:[%s5 + $0x8] sm:$0xff]
    %v1411 = vld [vmem:[%s5 + $0x10] sm:$0xff]
    %v1412 = vld [vmem:[%s5 + $0x18] sm:$0xff]
    %v1413 = vld [vmem:[%s5 + $0x20] sm:$0xff]
    %v1414 = vld [vmem:[%s5 + $0x28] sm:$0xff]
    %v1415 = vld [vmem:[%s5 + $0x30] sm:$0xff]
    %v1416 = vld [vmem:[%s5 + $0x38] sm:$0xff]
    %v1417 = vld [vmem:[%s5 + $0x40] sm:$0xff]
    %v1418 = vld [vmem:[%s5 + $0x48] sm:$0xff]
    %v1419 = vld [vmem:[%s5 + $0x50] sm:$0xff]
    %v1420 = vld [vmem:[%s5 + $0x58] sm:$0xff]
    %v1421 = vld [vmem:[%s5 + $0x60] sm:$0xff]
    %v1422 = vld [vmem:[%s5 + $0x68] sm:$0xff]
    %v1423 = vld [vmem:[%s5 + $0x70] sm:$0xff]
    %v1424 = vld [vmem:[%s5 + $0x78] sm:$0xff]
    %v1425 = vld [vmem:[%s5 + $0x80] sm:$0xff]
    %v1426 = vld [vmem:[%s5 + $0x88] sm:$0xff]
    %v1427 = vld [vmem:[%s5 + $0x90] sm:$0xff]
    %v1428 = vld [vmem:[%s5 + $0x98] sm:$0xff]
    %v1429 = vld [vmem:[%s5 + $0xa0] sm:$0xff]
    %v1430 = vld [vmem:[%s5 + $0xa8] sm:$0xff]
    %v1431 = vld [vmem:[%s5 + $0xb0] sm:$0xff]
    %v1432 = vld [vmem:[%s5 + $0xb8] sm:$0xff]
    %v1433 = vld [vmem:[%s5 + $0xc0] sm:$0xff]
    %v1434 = vld [vmem:[%s5 + $0xc8] sm:$0xff]
    %v1435 = vld [vmem:[%s5 + $0xd0] sm:$0xff]
    %v1436 = vld [vmem:[%s5 + $0xd8] sm:$0xff]
    %v1437 = vld [vmem:[%s5 + $0xe0] sm:$0xff]
    %v1438 = vld [vmem:[%s5 + $0xe8] sm:$0xff]
    %v1439 = vld [vmem:[%s5 + $0xf0] sm:$0xff]
    %v1440 = vld [vmem:[%s5 + $0xf8] sm:$0xff]
    %v1441 = vld [vmem:[%s5 + $0x100] sm:$0xff]
    %v1442 = vld [vmem:[%s5 + $0x108] sm:$0xff]
    %v1443 = vld [vmem:[%s5 + $0x110] sm:$0xff]
    %v1444 = vld [vmem:[%s5 + $0x118] sm:$0xff]
    %v1445 = vld [vmem:[%s5 + $0x120] sm:$0xff]
    %v1446 = vld [vmem:[%s5 + $0x128] sm:$0xff]
    %v1447 = vld [vmem:[%s5 + $0x130] sm:$0xff]
    %v1448 = vld [vmem:[%s5 + $0x138] sm:$0xff]
    %v1449 = vld [vmem:[%s5 + $0x140] sm:$0xff]
    %v1450 = vld [vmem:[%s5 + $0x148] sm:$0xff]
    %v1451 = vld [vmem:[%s5 + $0x150] sm:$0xff]
    %v1452 = vld [vmem:[%s5 + $0x158] sm:$0xff]
    %v1453 = vld [vmem:[%s5 + $0x160] sm:$0xff]
    %v1454 = vld [vmem:[%s6] sm:$0x1]
    %v1456 = vlaneseq
    %v1457 = vshrl.u32 %v1456, 7
    %v1458 = vsub.s32 0, %v1457
    %v1459 = vrot.slane %v1454, %v1458
    %v1462 = vsel %vm700, %v1363, 0
    %v1465 = vsel %vm700, %v1366, 0
    %v1468 = vsel %vm700, %v1369, 0
    %v1471 = vsel %vm700, %v1372, 0
    %v1474 = vsel %vm700, %v1375, 0
    %v1477 = vsel %vm700, %v1378, 0
    %v1480 = vsel %vm700, %v1381, 0
    %v1483 = vsel %vm700, %v1384, 0
    %v1486 = vsel %vm700, %v1387, 0
    %v1489 = vsel %vm700, %v1390, 0
    %v1492 = vsel %vm700, %v1393, 0
    %v1495 = vsel %vm700, %v1396, 0
    %v1498 = vsel %vm700, %v1399, 0
    %v1501 = vsel %vm700, %v1402, 0
    %v1504 = vsel %vm700, %v1405, 0
    %v1507 = vsel %vm700, %v1408, 0
    %1509 = vmatprep.subr.mxu0 0.0
    %1510 = vmatpush1.msra.mxu0 %v1424
    %1511 = vmatprep.subr.mxu0 0.0
    %1512 = vmatpush1.msra.mxu0 %v1423
    %1513 = vmatprep.subr.mxu0 0.0
    %1514 = vmatpush1.msra.mxu0 %v1422
    %1515 = vmatprep.subr.mxu0 0.0
    %1516 = vmatpush1.msra.mxu0 %v1421
    %1517 = vmatprep.subr.mxu0 0.0
    %1518 = vmatpush1.msra.mxu0 %v1420
    %1519 = vmatprep.subr.mxu0 0.0
    %1520 = vmatpush1.msra.mxu0 %v1419
    %1521 = vmatprep.subr.mxu0 0.0
    %1522 = vmatpush1.msra.mxu0 %v1418
    %1523 = vmatprep.subr.mxu0 0.0
    %1524 = vmatpush1.msra.mxu0 %v1417
    %1525 = vmatprep.subr.mxu0 0.0
    %1526 = vmatpush1.msra.mxu0 %v1416
    %1527 = vmatprep.subr.mxu0 0.0
    %1528 = vmatpush1.msra.mxu0 %v1415
    %1529 = vmatprep.subr.mxu0 0.0
    %1530 = vmatpush1.msra.mxu0 %v1414
    %1531 = vmatprep.subr.mxu0 0.0
    %1532 = vmatpush1.msra.mxu0 %v1413
    %1533 = vmatprep.subr.mxu0 0.0
    %1534 = vmatpush1.msra.mxu0 %v1412
    %1535 = vmatprep.subr.mxu0 0.0
    %1536 = vmatpush1.msra.mxu0 %v1411
    %1537 = vmatprep.subr.mxu0 0.0
    %1538 = vmatpush1.msra.mxu0 %v1410
    %1539 = vmatprep.subr.mxu0 0.0
    %1540 = vmatpush1.msra.mxu0 %v1409
    %1541 = vmatprep.subr.mxu0 0.0
    %1542 = vmatpush2.msra.mxu0 %v1440
    %1543 = vmatprep.subr.mxu0 0.0
    %1544 = vmatpush2.msra.mxu0 %v1439
    %1545 = vmatprep.subr.mxu0 0.0
    %1546 = vmatpush2.msra.mxu0 %v1438
    %1547 = vmatprep.subr.mxu0 0.0
    %1548 = vmatpush2.msra.mxu0 %v1437
    %1549 = vmatprep.subr.mxu0 0.0
    %1550 = vmatpush2.msra.mxu0 %v1436
    %1551 = vmatprep.subr.mxu0 0.0
    %1552 = vmatpush2.msra.mxu0 %v1435
    %1553 = vmatprep.subr.mxu0 0.0
    %1554 = vmatpush2.msra.mxu0 %v1434
    %1555 = vmatprep.subr.mxu0 0.0
    %1556 = vmatpush2.msra.mxu0 %v1433
    %1557 = vmatprep.subr.mxu0 0.0
    %1558 = vmatpush2.msra.mxu0 %v1432
    %1559 = vmatprep.subr.mxu0 0.0
    %1560 = vmatpush2.msra.mxu0 %v1431
    %1561 = vmatprep.subr.mxu0 0.0
    %1562 = vmatpush2.msra.mxu0 %v1430
    %1563 = vmatprep.subr.mxu0 0.0
    %1564 = vmatpush2.msra.mxu0 %v1429
    %1565 = vmatprep.subr.mxu0 0.0
    %1566 = vmatpush2.msra.mxu0 %v1428
    %1567 = vmatprep.subr.mxu0 0.0
    %1568 = vmatpush2.msra.mxu0 %v1427
    %1569 = vmatprep.subr.mxu0 0.0
    %1570 = vmatpush2.msra.mxu0 %v1426
    %1571 = vmatprep.subr.mxu0 0.0
    %1572 = vmatpush2.msra.mxu0 %v1425
    %1573 = vmatprep.mubr.f32.mxu0 %v1362
    %1574 = vmatmul.mubr.f32.gmra.mxu0 %v1361
    %v1575 = vpop.f32.mrf.mxu0
    %v1576 = vadd.f32 %v1459, %v1575
    %v1577 = vpop.f32.mrf.mxu0
    %1578 = vmatprep.mubr.f32.mxu0 %v1365
    %1579 = vmatmul.mubr.f32.gmra.mxu0 %v1364
    %v1580 = vpop.f32.mrf.mxu0
    %v1581 = vadd.f32 %v1459, %v1580
    %v1582 = vpop.f32.mrf.mxu0
    %1583 = vmatprep.mubr.f32.mxu0 %v1368
    %1584 = vmatmul.mubr.f32.gmra.mxu0 %v1367
    %v1585 = vpop.f32.mrf.mxu0
    %v1586 = vadd.f32 %v1459, %v1585
    %v1587 = vpop.f32.mrf.mxu0
    %1588 = vmatprep.mubr.f32.mxu0 %v1371
    %1589 = vmatmul.mubr.f32.gmra.mxu0 %v1370
    %v1590 = vpop.f32.mrf.mxu0
    %v1591 = vadd.f32 %v1459, %v1590
    %v1592 = vpop.f32.mrf.mxu0
    %1593 = vmatprep.mubr.f32.mxu0 %v1374
    %1594 = vmatmul.mubr.f32.gmra.mxu0 %v1373
    %v1595 = vpop.f32.mrf.mxu0
    %v1596 = vadd.f32 %v1459, %v1595
    %v1597 = vpop.f32.mrf.mxu0
    %1598 = vmatprep.mubr.f32.mxu0 %v1377
    %1599 = vmatmul.mubr.f32.gmra.mxu0 %v1376
    %v1600 = vpop.f32.mrf.mxu0
    %v1601 = vadd.f32 %v1459, %v1600
    %v1602 = vpop.f32.mrf.mxu0
    %1603 = vmatprep.mubr.f32.mxu0 %v1380
    %1604 = vmatmul.mubr.f32.gmra.mxu0 %v1379
    %v1605 = vpop.f32.mrf.mxu0
    %v1606 = vadd.f32 %v1459, %v1605
    %v1607 = vpop.f32.mrf.mxu0
    %1608 = vmatprep.mubr.f32.mxu0 %v1383
    %1609 = vmatmul.mubr.f32.gmra.mxu0 %v1382
    %v1610 = vpop.f32.mrf.mxu0
    %v1611 = vadd.f32 %v1459, %v1610
    %v1612 = vpop.f32.mrf.mxu0
    %1613 = vmatprep.mubr.f32.mxu0 %v1386
    %1614 = vmatmul.mubr.f32.gmra.mxu0 %v1385
    %v1615 = vpop.f32.mrf.mxu0
    %v1616 = vadd.f32 %v1459, %v1615
    %v1617 = vpop.f32.mrf.mxu0
    %1618 = vmatprep.mubr.f32.mxu0 %v1389
    %1619 = vmatmul.mubr.f32.gmra.mxu0 %v1388
    %v1620 = vpop.f32.mrf.mxu0
    %v1621 = vadd.f32 %v1459, %v1620
    %v1622 = vpop.f32.mrf.mxu0
    %1623 = vmatprep.mubr.f32.mxu0 %v1392
    %1624 = vmatmul.mubr.f32.gmra.mxu0 %v1391
    %v1625 = vpop.f32.mrf.mxu0
    %v1626 = vadd.f32 %v1459, %v1625
    %v1627 = vpop.f32.mrf.mxu0
    %1628 = vmatprep.mubr.f32.mxu0 %v1395
    %1629 = vmatmul.mubr.f32.gmra.mxu0 %v1394
    %v1630 = vpop.f32.mrf.mxu0
    %v1631 = vadd.f32 %v1459, %v1630
    %v1632 = vpop.f32.mrf.mxu0
    %1633 = vmatprep.mubr.f32.mxu0 %v1398
    %1634 = vmatmul.mubr.f32.gmra.mxu0 %v1397
    %v1635 = vpop.f32.mrf.mxu0
    %v1636 = vadd.f32 %v1459, %v1635
    %v1637 = vpop.f32.mrf.mxu0
    %1638 = vmatprep.mubr.f32.mxu0 %v1401
    %1639 = vmatmul.mubr.f32.gmra.mxu0 %v1400
    %v1640 = vpop.f32.mrf.mxu0
    %v1641 = vadd.f32 %v1459, %v1640
    %v1642 = vpop.f32.mrf.mxu0
    %1643 = vmatprep.mubr.f32.mxu0 %v1404
    %1644 = vmatmul.mubr.f32.gmra.mxu0 %v1403
    %v1645 = vpop.f32.mrf.mxu0
    %v1646 = vadd.f32 %v1459, %v1645
    %v1647 = vpop.f32.mrf.mxu0
    %1648 = vmatprep.mubr.f32.mxu0 %v1407
    %1649 = vmatmul.mubr.f32.gmra.mxu0 %v1406
    %v1650 = vpop.f32.mrf.mxu0
    %v1651 = vadd.f32 %v1459, %v1650
    %v1652 = vpop.f32.mrf.mxu0
    %1653 = vdwg.mxu0
    %1654 = vmatprep.subr.mxu0 0.0
    %1655 = vmatpush1.msra.mxu0 0.0
    %1656 = vmatprep.subr.mxu0 0.0
    %1657 = vmatpush1.msra.mxu0 0.0
    %1658 = vmatprep.subr.mxu0 0.0
    %1659 = vmatpush1.msra.mxu0 0.0
    %1660 = vmatprep.subr.mxu0 0.0
    %1661 = vmatpush1.msra.mxu0 %v1453
    %1662 = vmatprep.subr.mxu0 0.0
    %1663 = vmatpush1.msra.mxu0 %v1452
    %1664 = vmatprep.subr.mxu0 0.0
    %1665 = vmatpush1.msra.mxu0 %v1451
    %1666 = vmatprep.subr.mxu0 0.0
    %1667 = vmatpush1.msra.mxu0 %v1450
    %1668 = vmatprep.subr.mxu0 0.0
    %1669 = vmatpush1.msra.mxu0 %v1449
    %1670 = vmatprep.subr.mxu0 0.0
    %1671 = vmatpush1.msra.mxu0 %v1448
    %1672 = vmatprep.subr.mxu0 0.0
    %1673 = vmatpush1.msra.mxu0 %v1447
    %1674 = vmatprep.subr.mxu0 0.0
    %1675 = vmatpush1.msra.mxu0 %v1446
    %1676 = vmatprep.subr.mxu0 0.0
    %1677 = vmatpush1.msra.mxu0 %v1445
    %1678 = vmatprep.subr.mxu0 0.0
    %1679 = vmatpush1.msra.mxu0 %v1444
    %1680 = vmatprep.subr.mxu0 0.0
    %1681 = vmatpush1.msra.mxu0 %v1443
    %1682 = vmatprep.subr.mxu0 0.0
    %1683 = vmatpush1.msra.mxu0 %v1442
    %1684 = vmatprep.subr.mxu0 0.0
    %1685 = vmatpush1.msra.mxu0 %v1441
    %1686 = vmatprep.subr.mxu0 0.0
    %1687 = vmatpush2.msra.mxu0 0.0
    %1688 = vmatprep.subr.mxu0 0.0
    %1689 = vmatpush2.msra.mxu0 0.0
    %1690 = vmatprep.subr.mxu0 0.0
    %1691 = vmatpush2.msra.mxu0 0.0
    %1692 = vmatprep.subr.mxu0 0.0
    %1693 = vmatpush2.msra.mxu0 0.0
    %1694 = vmatprep.subr.mxu0 0.0
    %1695 = vmatpush2.msra.mxu0 0.0
    %1696 = vmatprep.subr.mxu0 0.0
    %1697 = vmatpush2.msra.mxu0 0.0
    %1698 = vmatprep.subr.mxu0 0.0
    %1699 = vmatpush2.msra.mxu0 0.0
    %1700 = vmatprep.subr.mxu0 0.0
    %1701 = vmatpush2.msra.mxu0 0.0
    %1702 = vmatprep.subr.mxu0 0.0
    %1703 = vmatpush2.msra.mxu0 0.0
    %1704 = vmatprep.subr.mxu0 0.0
    %1705 = vmatpush2.msra.mxu0 0.0
    %1706 = vmatprep.subr.mxu0 0.0
    %1707 = vmatpush2.msra.mxu0 0.0
    %1708 = vmatprep.subr.mxu0 0.0
    %1709 = vmatpush2.msra.mxu0 0.0
    %1710 = vmatprep.subr.mxu0 0.0
    %1711 = vmatpush2.msra.mxu0 0.0
    %1712 = vmatprep.subr.mxu0 0.0
    %1713 = vmatpush2.msra.mxu0 0.0
    %1714 = vmatprep.subr.mxu0 0.0
    %1715 = vmatpush2.msra.mxu0 0.0
    %1716 = vmatprep.subr.mxu0 0.0
    %1717 = vmatpush2.msra.mxu0 0.0
    %1718 = vmatprep.mubr.f32.mxu0 0.0
    %1719 = vmatmul.mubr.f32.gmra.mxu0 %v1462
    %v1720 = vpop.f32.mrf.mxu0
    %v1721 = vadd.f32 %v1576, %v1720
    %v1722 = vpop.f32.mrf.mxu0
    %1723 = vmatprep.mubr.f32.mxu0 0.0
    %1724 = vmatmul.mubr.f32.gmra.mxu0 %v1465
    %v1725 = vpop.f32.mrf.mxu0
    %v1726 = vadd.f32 %v1581, %v1725
    %v1727 = vpop.f32.mrf.mxu0
    %1728 = vmatprep.mubr.f32.mxu0 0.0
    %1729 = vmatmul.mubr.f32.gmra.mxu0 %v1468
    %v1730 = vpop.f32.mrf.mxu0
    %v1731 = vadd.f32 %v1586, %v1730
    %v1732 = vpop.f32.mrf.mxu0
    %1733 = vmatprep.mubr.f32.mxu0 0.0
    %1734 = vmatmul.mubr.f32.gmra.mxu0 %v1471
    %v1735 = vpop.f32.mrf.mxu0
    %v1736 = vadd.f32 %v1591, %v1735
    %v1737 = vpop.f32.mrf.mxu0
    %1738 = vmatprep.mubr.f32.mxu0 0.0
    %1739 = vmatmul.mubr.f32.gmra.mxu0 %v1474
    %v1740 = vpop.f32.mrf.mxu0
    %v1741 = vadd.f32 %v1596, %v1740
    %v1742 = vpop.f32.mrf.mxu0
    %1743 = vmatprep.mubr.f32.mxu0 0.0
    %1744 = vmatmul.mubr.f32.gmra.mxu0 %v1477
    %v1745 = vpop.f32.mrf.mxu0
    %v1746 = vadd.f32 %v1601, %v1745
    %v1747 = vpop.f32.mrf.mxu0
    %1748 = vmatprep.mubr.f32.mxu0 0.0
    %1749 = vmatmul.mubr.f32.gmra.mxu0 %v1480
    %v1750 = vpop.f32.mrf.mxu0
    %v1751 = vadd.f32 %v1606, %v1750
    %v1752 = vpop.f32.mrf.mxu0
    %1753 = vmatprep.mubr.f32.mxu0 0.0
    %1754 = vmatmul.mubr.f32.gmra.mxu0 %v1483
    %v1755 = vpop.f32.mrf.mxu0
    %v1756 = vadd.f32 %v1611, %v1755
    %v1757 = vpop.f32.mrf.mxu0
    %1758 = vmatprep.mubr.f32.mxu0 0.0
    %1759 = vmatmul.mubr.f32.gmra.mxu0 %v1486
    %v1760 = vpop.f32.mrf.mxu0
    %v1761 = vadd.f32 %v1616, %v1760
    %v1762 = vpop.f32.mrf.mxu0
    %1763 = vmatprep.mubr.f32.mxu0 0.0
    %1764 = vmatmul.mubr.f32.gmra.mxu0 %v1489
    %v1765 = vpop.f32.mrf.mxu0
    %v1766 = vadd.f32 %v1621, %v1765
    %v1767 = vpop.f32.mrf.mxu0
    %1768 = vmatprep.mubr.f32.mxu0 0.0
    %1769 = vmatmul.mubr.f32.gmra.mxu0 %v1492
    %v1770 = vpop.f32.mrf.mxu0
    %v1771 = vadd.f32 %v1626, %v1770
    %v1772 = vpop.f32.mrf.mxu0
    %1773 = vmatprep.mubr.f32.mxu0 0.0
    %1774 = vmatmul.mubr.f32.gmra.mxu0 %v1495
    %v1775 = vpop.f32.mrf.mxu0
    %v1776 = vadd.f32 %v1631, %v1775
    %v1777 = vpop.f32.mrf.mxu0
    %1778 = vmatprep.mubr.f32.mxu0 0.0
    %1779 = vmatmul.mubr.f32.gmra.mxu0 %v1498
    %v1780 = vpop.f32.mrf.mxu0
    %v1781 = vadd.f32 %v1636, %v1780
    %v1782 = vpop.f32.mrf.mxu0
    %1783 = vmatprep.mubr.f32.mxu0 0.0
    %1784 = vmatmul.mubr.f32.gmra.mxu0 %v1501
    %v1785 = vpop.f32.mrf.mxu0
    %v1786 = vadd.f32 %v1641, %v1785
    %v1787 = vpop.f32.mrf.mxu0
    %1788 = vmatprep.mubr.f32.mxu0 0.0
    %1789 = vmatmul.mubr.f32.gmra.mxu0 %v1504
    %v1790 = vpop.f32.mrf.mxu0
    %v1791 = vadd.f32 %v1646, %v1790
    %v1792 = vpop.f32.mrf.mxu0
    %1793 = vmatprep.mubr.f32.mxu0 0.0
    %1794 = vmatmul.mubr.f32.gmra.mxu0 %v1507
    %v1795 = vpop.f32.mrf.mxu0
    %v1796 = vadd.f32 %v1651, %v1795
    %v1797 = vpop.f32.mrf.mxu0
    %1798 = vdwg.mxu0
    %v1799 = vmax.f32 %v1721, 0.0
    %v1800 = vmax.f32 %v1726, 0.0
    %v1801 = vmax.f32 %v1731, 0.0
    %v1802 = vmax.f32 %v1736, 0.0
    %v1803 = vmax.f32 %v1741, 0.0
    %v1804 = vmax.f32 %v1746, 0.0
    %v1805 = vmax.f32 %v1751, 0.0
    %v1806 = vmax.f32 %v1756, 0.0
    %v1807 = vmax.f32 %v1761, 0.0
    %v1808 = vmax.f32 %v1766, 0.0
    %v1809 = vmax.f32 %v1771, 0.0
    %v1810 = vmax.f32 %v1776, 0.0
    %v1811 = vmax.f32 %v1781, 0.0
    %v1812 = vmax.f32 %v1786, 0.0
    %v1813 = vmax.f32 %v1791, 0.0
    %v1814 = vmax.f32 %v1796, 0.0
    %v1815 = vld [vmem:[%s7] sm:$0x1]
    %v1816 = vld [vmem:[#allocation2] sm:$0x1]
    %1818 = vset.pattern.permute.xlu0 0
    %1819 = vperm.xlu0 %1818, %v1816
    %v1820 = vpop.permute.xlu0 %1819
    %v1822 = vlaneseq
    %v1823 = vshrl.u32 %v1822, 7
    %v1824 = vsub.s32 0, %v1823
    %v1825 = vrot.slane %v1820, %v1824
    %1826 = vmatprep.subr.mxu0 0.0
    %1827 = vmatpush1.xpose.msra.mxu0 %v1814
    %1828 = vmatprep.subr.mxu0 0.0
    %1829 = vmatpush1.xpose.msra.mxu0 %v1813
    %1830 = vmatprep.subr.mxu0 0.0
    %1831 = vmatpush1.xpose.msra.mxu0 %v1812
    %1832 = vmatprep.subr.mxu0 0.0
    %1833 = vmatpush1.xpose.msra.mxu0 %v1811
    %1834 = vmatprep.subr.mxu0 0.0
    %1835 = vmatpush1.xpose.msra.mxu0 %v1810
    %1836 = vmatprep.subr.mxu0 0.0
    %1837 = vmatpush1.xpose.msra.mxu0 %v1809
    %1838 = vmatprep.subr.mxu0 0.0
    %1839 = vmatpush1.xpose.msra.mxu0 %v1808
    %1840 = vmatprep.subr.mxu0 0.0
    %1841 = vmatpush1.xpose.msra.mxu0 %v1807
    %1842 = vmatprep.subr.mxu0 0.0
    %1843 = vmatpush1.xpose.msra.mxu0 %v1806
    %1844 = vmatprep.subr.mxu0 0.0
    %1845 = vmatpush1.xpose.msra.mxu0 %v1805
    %1846 = vmatprep.subr.mxu0 0.0
    %1847 = vmatpush1.xpose.msra.mxu0 %v1804
    %1848 = vmatprep.subr.mxu0 0.0
    %1849 = vmatpush1.xpose.msra.mxu0 %v1803
    %1850 = vmatprep.subr.mxu0 0.0
    %1851 = vmatpush1.xpose.msra.mxu0 %v1802
    %1852 = vmatprep.subr.mxu0 0.0
    %1853 = vmatpush1.xpose.msra.mxu0 %v1801
    %1854 = vmatprep.subr.mxu0 0.0
    %1855 = vmatpush1.xpose.msra.mxu0 %v1800
    %1856 = vmatprep.subr.mxu0 0.0
    %1857 = vmatpush1.xpose.msra.mxu0 %v1799
    %1858 = vmatprep.subr.mxu0 0.0
    %1859 = vmatpush2.xpose.msra.mxu0 0.0
    %1860 = vmatprep.subr.mxu0 0.0
    %1861 = vmatpush2.xpose.msra.mxu0 0.0
    %1862 = vmatprep.subr.mxu0 0.0
    %1863 = vmatpush2.xpose.msra.mxu0 0.0
    %1864 = vmatprep.subr.mxu0 0.0
    %1865 = vmatpush2.xpose.msra.mxu0 0.0
    %1866 = vmatprep.subr.mxu0 0.0
    %1867 = vmatpush2.xpose.msra.mxu0 0.0
    %1868 = vmatprep.subr.mxu0 0.0
    %1869 = vmatpush2.xpose.msra.mxu0 0.0
    %1870 = vmatprep.subr.mxu0 0.0
    %1871 = vmatpush2.xpose.msra.mxu0 0.0
    %1872 = vmatprep.subr.mxu0 0.0
    %1873 = vmatpush2.xpose.msra.mxu0 0.0
    %1874 = vmatprep.subr.mxu0 0.0
    %1875 = vmatpush2.xpose.msra.mxu0 0.0
    %1876 = vmatprep.subr.mxu0 0.0
    %1877 = vmatpush2.xpose.msra.mxu0 0.0
    %1878 = vmatprep.subr.mxu0 0.0
    %1879 = vmatpush2.xpose.msra.mxu0 0.0
    %1880 = vmatprep.subr.mxu0 0.0
    %1881 = vmatpush2.xpose.msra.mxu0 0.0
    %1882 = vmatprep.subr.mxu0 0.0
    %1883 = vmatpush2.xpose.msra.mxu0 0.0
    %1884 = vmatprep.subr.mxu0 0.0
    %1885 = vmatpush2.xpose.msra.mxu0 0.0
    %1886 = vmatprep.subr.mxu0 0.0
    %1887 = vmatpush2.xpose.msra.mxu0 0.0
    %1888 = vmatprep.subr.mxu0 0.0
    %1889 = vmatpush2.xpose.msra.mxu0 0.0
    %1890 = vmatprep.mubr.f32.mxu0 0.0
    %1891 = vmatmul.mubr.f32.gmra.mxu0 %v1815
    %v1892 = vpop.f32.mrf.mxu0
    %v1893 = vadd.f32 %v1825, %v1892
    %v1894 = vpop.f32.mrf.mxu0
    %1895 = vdwg.mxu0
    %1896 = vst [vmem:[#allocation6] sm:$0x1] %v1893
    // Predicated region
    $region42: #{tpu_custom_call.1} parent=1 // pred_check
      _
    $region43: #{tpu_custom_call.1} parent=1 // pred_check_branch
      %1898 = sbr.rel (0) target = $region45
    $region44: #{tpu_custom_call.1} parent=1 // pred_region
      %s1900 = ssub.s32 16, 16
      %1901 = vsyncadd [#allocation5], %s1900
      %s1903 = sshll.u32 [#allocation6], 4
      %s1904 = int_to_ptr.vmem [resolvable:$true] %s1903
      %1906 = dma.vmem_to_hbm [thread:$0]  %s1904, 16, %s9, [#allocation5]
    $region45: #{tpu_custom_call.1} parent=1 // pred_fallthru
      _
    // Predicated region
    $region46: #{tpu_custom_call.1} parent=1 // pred_check
      _
    $region47: #{tpu_custom_call.1} parent=1 // pred_check_branch
      %1908 = sbr.rel (0) target = $region49
    $region48: #{tpu_custom_call.1} parent=1 // pred_region
      %1909 = dma.done [#allocation5], 16
    $region49: #{tpu_custom_call.1} parent=1 // pred_fallthru
      _
    %1910 = vsyncpa [#allocation4], 1
    %1911 = vsyncpa [#allocation5], 1

</llo_original>
